<compile_context>
chip_gen: v7x
topology: tpu7x:2x2x1
jax: 0.10.0
libtpu: 0.0.40
codegen_flags: <defaults>
</compile_context>

<pallas_src>
import functools

import jax
import jax.numpy as jnp
from jax.experimental import pallas as pl
from jax.experimental.pallas import tpu as pltpu

EPS = 1e-5           # PyTorch default eps for BatchNorm2d and LayerNorm
FUSE_MAX_HW = 2048   # single-tile fully-fused path for HW up to this
MAX_TP = 8192        # max pixel-tile width (lanes) for the tiled path


# ----------------------------- Pallas kernels ---------------------------------
def aff_fused_kernel(x_ref, r_ref, w1_ref, b1_ref, w2_ref, b2_ref,
                     gw1_ref, gb1_ref, ln1g_ref, ln1b_ref,
                     gw2_ref, gb2_ref, ln2g_ref, ln2b_ref,
                     o_ref, *, inv_hw):
    """Whole AFF forward for one (C, HW) tile (small feature maps).
    BN-folded local branch + in-kernel global branch + sigmoid blend:
    a single HBM pass over x / residual."""
    x = x_ref[...]                                    # (C, HW) f32
    r = r_ref[...]
    xa = x + r

    # ---- global attention (tiny, f32): pooled vector, lane-padded to 128 ----
    xa_mean = jnp.sum(xa, axis=1, keepdims=True) * inv_hw             # (C, 1)
    xam = jnp.broadcast_to(xa_mean, (xa_mean.shape[0], 128))          # MXU-friendly
    gh = jnp.dot(gw1_ref[...], xam, preferred_element_type=jnp.float32) + gb1_ref[...]
    mu = jnp.mean(gh, axis=0, keepdims=True)                          # LN over channels
    var = jnp.mean((gh - mu) ** 2, axis=0, keepdims=True)
    gh = (gh - mu) * jax.lax.rsqrt(var + EPS) * ln1g_ref[...] + ln1b_ref[...]
    gh = jnp.maximum(gh, 0.0)                                         # (IC, 128)
    xg = jnp.dot(gw2_ref[...], gh, preferred_element_type=jnp.float32) + gb2_ref[...]
    mu = jnp.mean(xg, axis=0, keepdims=True)
    var = jnp.mean((xg - mu) ** 2, axis=0, keepdims=True)
    xg = (xg - mu) * jax.lax.rsqrt(var + EPS) * ln2g_ref[...] + ln2b_ref[...]
    xg = xg[:, 0:1]                                    # (C, 1) — all lanes identical

    # ---- local attention: folded 1x1 conv+BN (bf16 MXU operands, f32 accum) ----
    h = jnp.dot(w1_ref[...], xa.astype(jnp.bfloat16),
                preferred_element_type=jnp.float32) + b1_ref[...]
    h = jnp.maximum(h, 0.0)
    s = jnp.dot(w2_ref[...], h.astype(jnp.bfloat16),
                preferred_element_type=jnp.float32) + b2_ref[...] + xg

    wei = jax.nn.sigmoid(s)
    # 2*x*wei + 2*r*(1-wei) == 2*(r + (x - r)*wei)
    o_ref[...] = 2.0 * (r + (x - r) * wei)


def aff_tiled_kernel(x_ref, r_ref, w1_ref, b1_ref, w2_ref, b2x_ref, o_ref):
    """One (C, TP) pixel tile: xl = conv2(relu(conv1(x+r))) with BN folded and
    the global-attention result pre-folded into b2x; out = 2*(r + (x-r)*sigmoid)."""
    x = x_ref[...]
    r = r_ref[...]
    xa = x + r
    h = jnp.dot(w1_ref[...], xa.astype(jnp.bfloat16),
                preferred_element_type=jnp.float32) + b1_ref[...]
    h = jnp.maximum(h, 0.0)
    s = jnp.dot(w2_ref[...], h.astype(jnp.bfloat16),
                preferred_element_type=jnp.float32) + b2x_ref[...]
    wei = jax.nn.sigmoid(s)
    o_ref[...] = 2.0 * (r + (x - r) * wei)


# ----------------------------- parameter prep ---------------------------------
def _fold_bn(w, b, bn):
    """Fold eval-mode BatchNorm (rows: gamma, beta, mean, var) into a 1x1 conv."""
    gamma, beta, mean, var = bn[0], bn[1], bn[2], bn[3]
    scale = gamma * jax.lax.rsqrt(var + EPS)          # (cout,)
    wf = w * scale[:, None]                           # (cout, cin)
    bf = (b - mean) * scale + beta                    # (cout,)
    return wf, bf[:, None]                            # bias as (cout, 1)


def prepare_params(p):
    """One-time parameter preprocessing (hoisted out of the per-call jit):
    fold eval-mode BNs into the 1x1 convs, reshape biases / affine params as
    (c, 1) columns, and cast the local-branch matmul weights to bf16 (native
    MXU path; accumulation stays f32 in-kernel)."""
    w1f, b1f = _fold_bn(p["w1"], p["b1"], p["bn1"])
    w2f, b2f = _fold_bn(p["w2"], p["b2"], p["bn2"])
    return {
        "w1": w1f.astype(jnp.bfloat16), "b1": b1f,
        "w2": w2f.astype(jnp.bfloat16), "b2": b2f,
        "gw1": p["gw1"], "gb1": p["gb1"][:, None],
        "ln1g": p["ln1"][0][:, None], "ln1b": p["ln1"][1][:, None],
        "gw2": p["gw2"], "gb2": p["gb2"][:, None],
        "ln2g": p["ln2"][0][:, None], "ln2b": p["ln2"][1][:, None],
    }


def _global_branch_xla(xa_mean, p):
    """Global attention path on the pooled (C,1) vector in plain XLA.
    Only used on the multi-tile path (the mean needs every pixel tile)."""
    gh = p["gw1"] @ xa_mean + p["gb1"]                # (IC, 1)
    mu = gh.mean()
    var = jnp.mean((gh - mu) ** 2)
    gh = (gh - mu) * jax.lax.rsqrt(var + EPS) * p["ln1g"] + p["ln1b"]
    gh = jnp.maximum(gh, 0.0)
    xg = p["gw2"] @ gh + p["gb2"]                     # (C, 1)
    mu = xg.mean()
    var = jnp.mean((xg - mu) ** 2)
    xg = (xg - mu) * jax.lax.rsqrt(var + EPS) * p["ln2g"] + p["ln2b"]
    return xg                                         # (C, 1)


# --------------------------------- wrapper -------------------------------------
def aff_forward(x, residual, prep):
    """x, residual: (1, C, H, W) float32 NCHW.  prep = prepare_params(params)."""
    B, C, H, W = x.shape
    assert B == 1, "AFF's LayerNorm([1,C,1,1]) only supports batch size 1"
    HW = H * W

    # NCHW with B=1 -> (C, HW): reshape only (channels->sublanes, pixels->lanes).
    x2 = x.reshape(C, HW)
    r2 = residual.reshape(C, HW)

    resident = lambda a: pl.BlockSpec(a.shape, lambda i: (0, 0))   # VMEM-resident

    if HW <= FUSE_MAX_HW:
        # Fully-fused single-tile path: global branch runs inside the kernel,
        # so x / residual are read from HBM exactly once and no tiny serial
        # XLA dispatches remain.
        data_spec = pl.BlockSpec((C, HW), lambda i: (0, 0))
        args = [x2, r2, prep["w1"], prep["b1"], prep["w2"], prep["b2"],
                prep["gw1"], prep["gb1"], prep["ln1g"], prep["ln1b"],
                prep["gw2"], prep["gb2"], prep["ln2g"], prep["ln2b"]]
        out = pl.pallas_call(
            functools.partial(aff_fused_kernel, inv_hw=1.0 / HW),
            out_shape=jax.ShapeDtypeStruct((C, HW), jnp.float32),
            grid=(1,),
            in_specs=[data_spec, data_spec] + [resident(a) for a in args[2:]],
            out_specs=data_spec,
            compiler_params=pltpu.CompilerParams(
                dimension_semantics=("arbitrary",)),
        )(*args)
    else:
        # Multi-tile path: global branch needs all pixels -> pooled vector in
        # XLA, folded into conv2's bias; kernel tiles the pixel (lane) axis.
        xa_mean = jnp.mean(x2 + r2, axis=1, keepdims=True)            # (C, 1)
        b2x = prep["b2"] + _global_branch_xla(xa_mean, prep)          # (C, 1)

        # >= 2 grid steps (v7x megacore) and large lane-dense tiles (amortize
        # the ~0.35us/step overhead); double-buffered tiles stay well under the
        # explicit 40 MiB VMEM budget on every generation (v7x physical 64 MiB).
        half = (-(-HW // 2) + 127) // 128 * 128       # ceil(HW/2) rounded to 128
        TP = min(MAX_TP, half)
        data_spec = pl.BlockSpec((C, TP), lambda i: (0, i))
        args = [x2, r2, prep["w1"], prep["b1"], prep["w2"], b2x]
        out = pl.pallas_call(
            aff_tiled_kernel,
            out_shape=jax.ShapeDtypeStruct((C, HW), jnp.float32),
            grid=(pl.cdiv(HW, TP),),
            in_specs=[data_spec, data_spec] + [resident(a) for a in args[2:]],
            out_specs=data_spec,
            compiler_params=pltpu.CompilerParams(
                dimension_semantics=("parallel",),
                vmem_limit_bytes=40 * 1024 * 1024),
        )(*args)

    return out.reshape(B, C, H, W)


# ----------------------------- params & reference -----------------------------
def init_params(key, channels=64, r=1):
    ic = channels // r
    ks = jax.random.split(key, 20)

    def conv_w(k, cout, cin):            # PyTorch conv weight layout (cout, cin)
        b = 1.0 / jnp.sqrt(cin)
        return jax.random.uniform(k, (cout, cin), jnp.float32, -b, b)

    def bias(k, n):
        return jax.random.uniform(k, (n,), jnp.float32, -0.5, 0.5)

    def norm_affine(k1, k2, n):          # rows: [gamma, beta]
        g = jax.random.uniform(k1, (n,), jnp.float32, 0.5, 1.5)
        b = jax.random.uniform(k2, (n,), jnp.float32, -0.5, 0.5)
        return jnp.stack([g, b], axis=0)

    def bn_stats(k1, k2, k3, k4, n):     # rows: [gamma, beta, running_mean, running_var]
        g = jax.random.uniform(k1, (n,), jnp.float32, 0.5, 1.5)
        b = jax.random.uniform(k2, (n,), jnp.float32, -0.5, 0.5)
        m = jax.random.uniform(k3, (n,), jnp.float32, -0.5, 0.5)
        v = jax.random.uniform(k4, (n,), jnp.float32, 0.5, 1.5)
        return jnp.stack([g, b, m, v], axis=0)

    return {
        "w1": conv_w(ks[0], ic, channels), "b1": bias(ks[1], ic),
        "bn1": bn_stats(ks[2], ks[3], ks[4], ks[5], ic),
        "w2": conv_w(ks[6], channels, ic), "b2": bias(ks[7], channels),
        "bn2": bn_stats(ks[8], ks[9], ks[10], ks[11], channels),
        "gw1": conv_w(ks[12], ic, channels), "gb1": bias(ks[13], ic),
        "ln1": norm_affine(ks[14], ks[15], ic),
        "gw2": conv_w(ks[16], channels, ic), "gb2": bias(ks[17], channels),
        "ln2": norm_affine(ks[18], ks[19], channels),
    }


def aff_reference(x, residual, p):
    """Pure-JAX NCHW reference mirroring the PyTorch forward (eval mode, B=1)."""
    def conv1x1(t, w, b):                # w (cout, cin), b (cout,)
        return jnp.einsum("bchw,oc->bohw", t, w) + b[None, :, None, None]

    def bn(t, stats):
        g, be, m, v = stats
        return ((t - m[None, :, None, None]) / jnp.sqrt(v + EPS)[None, :, None, None]
                * g[None, :, None, None] + be[None, :, None, None])

    xa = x + residual
    h = jnp.maximum(bn(conv1x1(xa, p["w1"], p["b1"]), p["bn1"]), 0.0)
    xl = bn(conv1x1(h, p["w2"], p["b2"]), p["bn2"])

    g = xa.mean(axis=(2, 3))                                         # (B, C)
    gh = g @ p["gw1"].T + p["gb1"]
    mu = gh.mean(-1, keepdims=True); var = ((gh - mu) ** 2).mean(-1, keepdims=True)
    gh = (gh - mu) / jnp.sqrt(var + EPS) * p["ln1"][0] + p["ln1"][1]
    gh = jnp.maximum(gh, 0.0)
    xg = gh @ p["gw2"].T + p["gb2"]
    mu = xg.mean(-1, keepdims=True); var = ((xg - mu) ** 2).mean(-1, keepdims=True)
    xg = (xg - mu) / jnp.sqrt(var + EPS) * p["ln2"][0] + p["ln2"][1]
    xg = xg[:, :, None, None]

    wei = jax.nn.sigmoid(xl + xg)
    return 2.0 * x * wei + 2.0 * residual * (1.0 - wei)


# ----------------------------------- main --------------------------------------
if __name__ == "__main__":
    key = jax.random.PRNGKey(0)
    k_x, k_r, k_p, k_x2, k_r2 = jax.random.split(key, 5)

    C = 64                                # B must be 1 (LayerNorm([1,C,1,1]) semantics)
    params = init_params(k_p, channels=C, r=1)
    prep = prepare_params(params)         # one-time BN fold / bf16 cast (outside jit)
    fwd = jax.jit(aff_forward)

    # Tolerance accounts for bf16 MXU operands in the local-attention matmuls.
    RTOL = ATOL = 2e-2

    # 1) small feature map -> fully-fused single-tile kernel
    x = jax.random.normal(k_x, (1, C, 16, 16), jnp.float32)
    res = jax.random.normal(k_r, (1, C, 16, 16), jnp.float32)
    out = jax.block_until_ready(fwd(x, res, prep))
    ref = aff_reference(x, res, params)
    assert out.shape == x.shape
    assert jnp.allclose(out, ref, rtol=RTOL, atol=ATOL), "fused path mismatch vs reference"

    # 2) larger feature map -> tiled (multi-step, megacore-parallel) kernel
    xb = jax.random.normal(k_x2, (1, C, 128, 128), jnp.float32)
    rb = jax.random.normal(k_r2, (1, C, 128, 128), jnp.float32)
    outb = jax.block_until_ready(fwd(xb, rb, prep))
    refb = aff_reference(xb, rb, params)
    assert jnp.allclose(outb, refb, rtol=RTOL, atol=ATOL), "tiled path mismatch vs reference"

    print("KERNEL_OK")
</pallas_src>

<mosaic_0001>
module attributes {stable_mosaic.version = 11 : i64} {
  func.func @aff_fused_kernel(%arg0: i32, %arg1: memref<64x256xf32, #tpu.memory_space<vmem>>, %arg2: memref<64x256xf32, #tpu.memory_space<vmem>>, %arg3: memref<64x64xbf16, #tpu.memory_space<vmem>>, %arg4: memref<64x1xf32, #tpu.memory_space<vmem>>, %arg5: memref<64x64xbf16, #tpu.memory_space<vmem>>, %arg6: memref<64x1xf32, #tpu.memory_space<vmem>>, %arg7: memref<64x64xf32, #tpu.memory_space<vmem>>, %arg8: memref<64x1xf32, #tpu.memory_space<vmem>>, %arg9: memref<64x1xf32, #tpu.memory_space<vmem>>, %arg10: memref<64x1xf32, #tpu.memory_space<vmem>>, %arg11: memref<64x64xf32, #tpu.memory_space<vmem>>, %arg12: memref<64x1xf32, #tpu.memory_space<vmem>>, %arg13: memref<64x1xf32, #tpu.memory_space<vmem>>, %arg14: memref<64x1xf32, #tpu.memory_space<vmem>>, %arg15: memref<64x256xf32, #tpu.memory_space<vmem>>) attributes {dimension_semantics = [#tpu.dimension_semantics<arbitrary>], iteration_bounds = array<i64: 1>, scalar_prefetch = 0 : i64, scratch_operands = 0 : i64, tpu.core_type = #tpu.core_type<tc>, window_params = [{pipeline_mode = #tpu.pipeline_mode<synchronous>, transform_indices = @transform_0, window_bounds = array<i64: 64, 256>}, {pipeline_mode = #tpu.pipeline_mode<synchronous>, transform_indices = @transform_1, window_bounds = array<i64: 64, 256>}, {pipeline_mode = #tpu.pipeline_mode<synchronous>, transform_indices = @transform_2, window_bounds = array<i64: 64, 64>}, {pipeline_mode = #tpu.pipeline_mode<synchronous>, transform_indices = @transform_3, window_bounds = array<i64: 64, 1>}, {pipeline_mode = #tpu.pipeline_mode<synchronous>, transform_indices = @transform_4, window_bounds = array<i64: 64, 64>}, {pipeline_mode = #tpu.pipeline_mode<synchronous>, transform_indices = @transform_5, window_bounds = array<i64: 64, 1>}, {pipeline_mode = #tpu.pipeline_mode<synchronous>, transform_indices = @transform_6, window_bounds = array<i64: 64, 64>}, {pipeline_mode = #tpu.pipeline_mode<synchronous>, transform_indices = @transform_7, window_bounds = array<i64: 64, 1>}, {pipeline_mode = #tpu.pipeline_mode<synchronous>, transform_indices = @transform_8, window_bounds = array<i64: 64, 1>}, {pipeline_mode = #tpu.pipeline_mode<synchronous>, transform_indices = @transform_9, window_bounds = array<i64: 64, 1>}, {pipeline_mode = #tpu.pipeline_mode<synchronous>, transform_indices = @transform_10, window_bounds = array<i64: 64, 64>}, {pipeline_mode = #tpu.pipeline_mode<synchronous>, transform_indices = @transform_11, window_bounds = array<i64: 64, 1>}, {pipeline_mode = #tpu.pipeline_mode<synchronous>, transform_indices = @transform_12, window_bounds = array<i64: 64, 1>}, {pipeline_mode = #tpu.pipeline_mode<synchronous>, transform_indices = @transform_13, window_bounds = array<i64: 64, 1>}, {pipeline_mode = #tpu.pipeline_mode<synchronous>, transform_indices = @transform_14, window_bounds = array<i64: 64, 256>}]} {
    %c0 = arith.constant 0 : index
    %c0_0 = arith.constant 0 : index
    %0 = vector.load %arg1[%c0, %c0_0] : memref<64x256xf32, #tpu.memory_space<vmem>>, vector<64x256xf32>
    %c0_1 = arith.constant 0 : index
    %c0_2 = arith.constant 0 : index
    %1 = vector.load %arg2[%c0_1, %c0_2] : memref<64x256xf32, #tpu.memory_space<vmem>>, vector<64x256xf32>
    %2 = arith.addf %0, %1 : vector<64x256xf32>
    %cst = arith.constant dense<0.000000e+00> : vector<64xf32>
    %3 = vector.multi_reduction <add>, %2, %cst [1] : vector<64x256xf32> to vector<64xf32>
    %4 = vector.shape_cast %3 : vector<64xf32> to vector<64x1xf32>
    %cst_3 = arith.constant 3.906250e-03 : f32
    %5 = vector.broadcast %cst_3 : f32 to vector<64x1xf32>
    %6 = arith.mulf %4, %5 : vector<64x1xf32>
    %7 = vector.shape_cast %6 : vector<64x1xf32> to vector<64x1xf32>
    %8 = vector.broadcast %7 : vector<64x1xf32> to vector<64x128xf32>
    %c0_4 = arith.constant 0 : index
    %c0_5 = arith.constant 0 : index
    %9 = vector.load %arg7[%c0_4, %c0_5] : memref<64x64xf32, #tpu.memory_space<vmem>>, vector<64x64xf32>
    %cst_6 = arith.constant dense<0.000000e+00> : vector<64x128xf32>
    %10 = tpu.matmul %9, %8, %cst_6 {dimension_numbers = #tpu.dot_dimension_numbers<[1], [0], [0], [1], [0, 0, 1, 1], [], []>} : vector<64x64xf32>, vector<64x128xf32>, vector<64x128xf32> -> vector<64x128xf32>
    %c0_7 = arith.constant 0 : index
    %c0_8 = arith.constant 0 : index
    %11 = vector.load %arg8[%c0_7, %c0_8] : memref<64x1xf32, #tpu.memory_space<vmem>>, vector<64x1xf32>
    %12 = vector.broadcast %11 : vector<64x1xf32> to vector<64x128xf32>
    %13 = arith.addf %10, %12 : vector<64x128xf32>
    %cst_9 = arith.constant dense<0.000000e+00> : vector<128xf32>
    %14 = vector.multi_reduction <add>, %13, %cst_9 [0] : vector<64x128xf32> to vector<128xf32>
    %15 = vector.shape_cast %14 : vector<128xf32> to vector<1x128xf32>
    %cst_10 = arith.constant 6.400000e+01 : f32
    %16 = vector.broadcast %cst_10 : f32 to vector<1x128xf32>
    %17 = arith.divf %15, %16 : vector<1x128xf32>
    %18 = vector.broadcast %17 : vector<1x128xf32> to vector<64x128xf32>
    %19 = arith.subf %13, %18 : vector<64x128xf32>
    %20 = arith.mulf %19, %19 : vector<64x128xf32>
    %cst_11 = arith.constant dense<0.000000e+00> : vector<128xf32>
    %21 = vector.multi_reduction <add>, %20, %cst_11 [0] : vector<64x128xf32> to vector<128xf32>
    %22 = vector.shape_cast %21 : vector<128xf32> to vector<1x128xf32>
    %cst_12 = arith.constant 6.400000e+01 : f32
    %23 = vector.broadcast %cst_12 : f32 to vector<1x128xf32>
    %24 = arith.divf %22, %23 : vector<1x128xf32>
    %25 = vector.broadcast %17 : vector<1x128xf32> to vector<64x128xf32>
    %26 = arith.subf %13, %25 : vector<64x128xf32>
    %cst_13 = arith.constant 9.99999974E-6 : f32
    %27 = vector.broadcast %cst_13 : f32 to vector<1x128xf32>
    %28 = arith.addf %24, %27 : vector<1x128xf32>
    %29 = math.rsqrt %28 : vector<1x128xf32>
    %30 = vector.broadcast %29 : vector<1x128xf32> to vector<64x128xf32>
    %31 = arith.mulf %26, %30 : vector<64x128xf32>
    %c0_14 = arith.constant 0 : index
    %c0_15 = arith.constant 0 : index
    %32 = vector.load %arg9[%c0_14, %c0_15] : memref<64x1xf32, #tpu.memory_space<vmem>>, vector<64x1xf32>
    %33 = vector.broadcast %32 : vector<64x1xf32> to vector<64x128xf32>
    %34 = arith.mulf %31, %33 : vector<64x128xf32>
    %c0_16 = arith.constant 0 : index
    %c0_17 = arith.constant 0 : index
    %35 = vector.load %arg10[%c0_16, %c0_17] : memref<64x1xf32, #tpu.memory_space<vmem>>, vector<64x1xf32>
    %36 = vector.broadcast %35 : vector<64x1xf32> to vector<64x128xf32>
    %37 = arith.addf %34, %36 : vector<64x128xf32>
    %cst_18 = arith.constant 0.000000e+00 : f32
    %38 = vector.broadcast %cst_18 : f32 to vector<64x128xf32>
    %39 = arith.maximumf %37, %38 : vector<64x128xf32>
    %c0_19 = arith.constant 0 : index
    %c0_20 = arith.constant 0 : index
    %40 = vector.load %arg11[%c0_19, %c0_20] : memref<64x64xf32, #tpu.memory_space<vmem>>, vector<64x64xf32>
    %cst_21 = arith.constant dense<0.000000e+00> : vector<64x128xf32>
    %41 = tpu.matmul %40, %39, %cst_21 {dimension_numbers = #tpu.dot_dimension_numbers<[1], [0], [0], [1], [0, 0, 1, 1], [], []>} : vector<64x64xf32>, vector<64x128xf32>, vector<64x128xf32> -> vector<64x128xf32>
    %c0_22 = arith.constant 0 : index
    %c0_23 = arith.constant 0 : index
    %42 = vector.load %arg12[%c0_22, %c0_23] : memref<64x1xf32, #tpu.memory_space<vmem>>, vector<64x1xf32>
    %43 = vector.broadcast %42 : vector<64x1xf32> to vector<64x128xf32>
    %44 = arith.addf %41, %43 : vector<64x128xf32>
    %cst_24 = arith.constant dense<0.000000e+00> : vector<128xf32>
    %45 = vector.multi_reduction <add>, %44, %cst_24 [0] : vector<64x128xf32> to vector<128xf32>
    %46 = vector.shape_cast %45 : vector<128xf32> to vector<1x128xf32>
    %cst_25 = arith.constant 6.400000e+01 : f32
    %47 = vector.broadcast %cst_25 : f32 to vector<1x128xf32>
    %48 = arith.divf %46, %47 : vector<1x128xf32>
    %49 = vector.broadcast %48 : vector<1x128xf32> to vector<64x128xf32>
    %50 = arith.subf %44, %49 : vector<64x128xf32>
    %51 = arith.mulf %50, %50 : vector<64x128xf32>
    %cst_26 = arith.constant dense<0.000000e+00> : vector<128xf32>
    %52 = vector.multi_reduction <add>, %51, %cst_26 [0] : vector<64x128xf32> to vector<128xf32>
    %53 = vector.shape_cast %52 : vector<128xf32> to vector<1x128xf32>
    %cst_27 = arith.constant 6.400000e+01 : f32
    %54 = vector.broadcast %cst_27 : f32 to vector<1x128xf32>
    %55 = arith.divf %53, %54 : vector<1x128xf32>
    %56 = vector.broadcast %48 : vector<1x128xf32> to vector<64x128xf32>
    %57 = arith.subf %44, %56 : vector<64x128xf32>
    %cst_28 = arith.constant 9.99999974E-6 : f32
    %58 = vector.broadcast %cst_28 : f32 to vector<1x128xf32>
    %59 = arith.addf %55, %58 : vector<1x128xf32>
    %60 = math.rsqrt %59 : vector<1x128xf32>
    %61 = vector.broadcast %60 : vector<1x128xf32> to vector<64x128xf32>
    %62 = arith.mulf %57, %61 : vector<64x128xf32>
    %c0_29 = arith.constant 0 : index
    %c0_30 = arith.constant 0 : index
    %63 = vector.load %arg13[%c0_29, %c0_30] : memref<64x1xf32, #tpu.memory_space<vmem>>, vector<64x1xf32>
    %64 = vector.broadcast %63 : vector<64x1xf32> to vector<64x128xf32>
    %65 = arith.mulf %62, %64 : vector<64x128xf32>
    %c0_31 = arith.constant 0 : index
    %c0_32 = arith.constant 0 : index
    %66 = vector.load %arg14[%c0_31, %c0_32] : memref<64x1xf32, #tpu.memory_space<vmem>>, vector<64x1xf32>
    %67 = vector.broadcast %66 : vector<64x1xf32> to vector<64x128xf32>
    %68 = arith.addf %65, %67 : vector<64x128xf32>
    %69 = vector.extract_strided_slice %68 {offsets = [0, 0], sizes = [64, 1], strides = [1, 1]} : vector<64x128xf32> to vector<64x1xf32>
    %c0_33 = arith.constant 0 : index
    %c0_34 = arith.constant 0 : index
    %70 = vector.load %arg3[%c0_33, %c0_34] : memref<64x64xbf16, #tpu.memory_space<vmem>>, vector<64x64xbf16>
    %71 = arith.truncf %2 : vector<64x256xf32> to vector<64x256xbf16>
    %cst_35 = arith.constant dense<0.000000e+00> : vector<64x256xf32>
    %72 = tpu.matmul %70, %71, %cst_35 {dimension_numbers = #tpu.dot_dimension_numbers<[1], [0], [0], [1], [0, 0, 1, 1], [], []>} : vector<64x64xbf16>, vector<64x256xbf16>, vector<64x256xf32> -> vector<64x256xf32>
    %c0_36 = arith.constant 0 : index
    %c0_37 = arith.constant 0 : index
    %73 = vector.load %arg4[%c0_36, %c0_37] : memref<64x1xf32, #tpu.memory_space<vmem>>, vector<64x1xf32>
    %74 = vector.broadcast %73 : vector<64x1xf32> to vector<64x256xf32>
    %75 = arith.addf %72, %74 : vector<64x256xf32>
    %cst_38 = arith.constant 0.000000e+00 : f32
    %76 = vector.broadcast %cst_38 : f32 to vector<64x256xf32>
    %77 = arith.maximumf %75, %76 : vector<64x256xf32>
    %c0_39 = arith.constant 0 : index
    %c0_40 = arith.constant 0 : index
    %78 = vector.load %arg5[%c0_39, %c0_40] : memref<64x64xbf16, #tpu.memory_space<vmem>>, vector<64x64xbf16>
    %79 = arith.truncf %77 : vector<64x256xf32> to vector<64x256xbf16>
    %cst_41 = arith.constant dense<0.000000e+00> : vector<64x256xf32>
    %80 = tpu.matmul %78, %79, %cst_41 {dimension_numbers = #tpu.dot_dimension_numbers<[1], [0], [0], [1], [0, 0, 1, 1], [], []>} : vector<64x64xbf16>, vector<64x256xbf16>, vector<64x256xf32> -> vector<64x256xf32>
    %c0_42 = arith.constant 0 : index
    %c0_43 = arith.constant 0 : index
    %81 = vector.load %arg6[%c0_42, %c0_43] : memref<64x1xf32, #tpu.memory_space<vmem>>, vector<64x1xf32>
    %82 = vector.broadcast %81 : vector<64x1xf32> to vector<64x256xf32>
    %83 = arith.addf %80, %82 : vector<64x256xf32>
    %84 = vector.broadcast %69 : vector<64x1xf32> to vector<64x256xf32>
    %85 = arith.addf %83, %84 : vector<64x256xf32>
    %86 = arith.negf %85 : vector<64x256xf32>
    %87 = math.exp %86 : vector<64x256xf32>
    %cst_44 = arith.constant 1.000000e+00 : f32
    %88 = vector.broadcast %cst_44 : f32 to vector<64x256xf32>
    %89 = arith.addf %88, %87 : vector<64x256xf32>
    %90 = arith.divf %88, %89 : vector<64x256xf32>
    %91 = arith.subf %0, %1 : vector<64x256xf32>
    %92 = arith.mulf %91, %90 : vector<64x256xf32>
    %93 = arith.addf %1, %92 : vector<64x256xf32>
    %cst_45 = arith.constant 2.000000e+00 : f32
    %94 = vector.broadcast %cst_45 : f32 to vector<64x256xf32>
    %95 = arith.mulf %94, %93 : vector<64x256xf32>
    %c0_46 = arith.constant 0 : index
    %c0_47 = arith.constant 0 : index
    %96 = vector.load %arg15[%c0_46, %c0_47] : memref<64x256xf32, #tpu.memory_space<vmem>>, vector<64x256xf32>
    tpu.vector_store %arg15[%c0_46, %c0_47], %95 {strides = array<i32>} : memref<64x256xf32, #tpu.memory_space<vmem>>, vector<64x256xf32>,
    return
  }
  func.func @transform_0(%arg0: i32) -> (i32, i32) {
    %c0_i32 = arith.constant 0 : i32
    %c0_i32_0 = arith.constant 0 : i32
    %c0_i32_1 = arith.constant 0 : i32
    return %c0_i32, %c0_i32_0 : i32, i32
  }
  func.func @transform_1(%arg0: i32) -> (i32, i32) {
    %c0_i32 = arith.constant 0 : i32
    %c0_i32_0 = arith.constant 0 : i32
    %c0_i32_1 = arith.constant 0 : i32
    return %c0_i32, %c0_i32_0 : i32, i32
  }
  func.func @transform_2(%arg0: i32) -> (i32, i32) {
    %c0_i32 = arith.constant 0 : i32
    %c0_i32_0 = arith.constant 0 : i32
    %c0_i32_1 = arith.constant 0 : i32
    return %c0_i32, %c0_i32_0 : i32, i32
  }
  func.func @transform_3(%arg0: i32) -> (i32, i32) {
    %c0_i32 = arith.constant 0 : i32
    %c0_i32_0 = arith.constant 0 : i32
    %c0_i32_1 = arith.constant 0 : i32
    return %c0_i32, %c0_i32_0 : i32, i32
  }
  func.func @transform_4(%arg0: i32) -> (i32, i32) {
    %c0_i32 = arith.constant 0 : i32
    %c0_i32_0 = arith.constant 0 : i32
    %c0_i32_1 = arith.constant 0 : i32
    return %c0_i32, %c0_i32_0 : i32, i32
  }
  func.func @transform_5(%arg0: i32) -> (i32, i32) {
    %c0_i32 = arith.constant 0 : i32
    %c0_i32_0 = arith.constant 0 : i32
    %c0_i32_1 = arith.constant 0 : i32
    return %c0_i32, %c0_i32_0 : i32, i32
  }
  func.func @transform_6(%arg0: i32) -> (i32, i32) {
    %c0_i32 = arith.constant 0 : i32
    %c0_i32_0 = arith.constant 0 : i32
    %c0_i32_1 = arith.constant 0 : i32
    return %c0_i32, %c0_i32_0 : i32, i32
  }
  func.func @transform_7(%arg0: i32) -> (i32, i32) {
    %c0_i32 = arith.constant 0 : i32
    %c0_i32_0 = arith.constant 0 : i32
    %c0_i32_1 = arith.constant 0 : i32
    return %c0_i32, %c0_i32_0 : i32, i32
  }
  func.func @transform_8(%arg0: i32) -> (i32, i32) {
    %c0_i32 = arith.constant 0 : i32
    %c0_i32_0 = arith.constant 0 : i32
    %c0_i32_1 = arith.constant 0 : i32
    return %c0_i32, %c0_i32_0 : i32, i32
  }
  func.func @transform_9(%arg0: i32) -> (i32, i32) {
    %c0_i32 = arith.constant 0 : i32
    %c0_i32_0 = arith.constant 0 : i32
    %c0_i32_1 = arith.constant 0 : i32
    return %c0_i32, %c0_i32_0 : i32, i32
  }
  func.func @transform_10(%arg0: i32) -> (i32, i32) {
    %c0_i32 = arith.constant 0 : i32
    %c0_i32_0 = arith.constant 0 : i32
    %c0_i32_1 = arith.constant 0 : i32
    return %c0_i32, %c0_i32_0 : i32, i32
  }
  func.func @transform_11(%arg0: i32) -> (i32, i32) {
    %c0_i32 = arith.constant 0 : i32
    %c0_i32_0 = arith.constant 0 : i32
    %c0_i32_1 = arith.constant 0 : i32
    return %c0_i32, %c0_i32_0 : i32, i32
  }
  func.func @transform_12(%arg0: i32) -> (i32, i32) {
    %c0_i32 = arith.constant 0 : i32
    %c0_i32_0 = arith.constant 0 : i32
    %c0_i32_1 = arith.constant 0 : i32
    return %c0_i32, %c0_i32_0 : i32, i32
  }
  func.func @transform_13(%arg0: i32) -> (i32, i32) {
    %c0_i32 = arith.constant 0 : i32
    %c0_i32_0 = arith.constant 0 : i32
    %c0_i32_1 = arith.constant 0 : i32
    return %c0_i32, %c0_i32_0 : i32, i32
  }
  func.func @transform_14(%arg0: i32) -> (i32, i32) {
    %c0_i32 = arith.constant 0 : i32
    %c0_i32_0 = arith.constant 0 : i32
    %c0_i32_1 = arith.constant 0 : i32
    return %c0_i32, %c0_i32_0 : i32, i32
  }
}

</mosaic_0001>

<llo_original>
// kernel: aff_forward.1
$region0: #{aff_forward.1}
  #allocation0 [shape = 'u32[]', space=smem, size = 0x4, offset = 0x4, fixed_abs, tag = 'smem constant byte address 0x4 - core index']
  #allocation1 [shape = 'u32[144,128]{1,0:T(1,128)}', space=vmem, size = 0x12000, scoped, tag = 'internal scratch']
  %s0 = inlined_call_operand.vmem [shape: f32[64,256], index: 0, kind: input, shape index: {}]
  %s1 = inlined_call_operand.vmem [shape: f32[64,256], index: 1, kind: input, shape index: {}]
  %s2 = inlined_call_operand.vmem [shape: bf16[64,64], index: 2, kind: input, shape index: {}]
  %s3 = inlined_call_operand.vmem [shape: f32[64,1], index: 3, kind: input, shape index: {}]
  %s4 = inlined_call_operand.vmem [shape: bf16[64,64], index: 4, kind: input, shape index: {}]
  %s5 = inlined_call_operand.vmem [shape: f32[64,1], index: 5, kind: input, shape index: {}]
  %s6 = inlined_call_operand.vmem [shape: f32[64,64], index: 6, kind: input, shape index: {}]
  %s7 = inlined_call_operand.vmem [shape: f32[64,1], index: 7, kind: input, shape index: {}]
  %s8 = inlined_call_operand.vmem [shape: f32[64,1], index: 8, kind: input, shape index: {}]
  %s9 = inlined_call_operand.vmem [shape: f32[64,1], index: 9, kind: input, shape index: {}]
  %s10 = inlined_call_operand.vmem [shape: f32[64,64], index: 10, kind: input, shape index: {}]
  %s11 = inlined_call_operand.vmem [shape: f32[64,1], index: 11, kind: input, shape index: {}]
  %s12 = inlined_call_operand.vmem [shape: f32[64,1], index: 12, kind: input, shape index: {}]
  %s13 = inlined_call_operand.vmem [shape: f32[64,1], index: 13, kind: input, shape index: {}]
  %s14 = inlined_call_operand.vmem [shape: f32[64,256], index: 14, kind: output, shape index: {}]
  %s15 = sld [smem:[#allocation0]]
  $region66: #{aff_forward.1} parent=0
    _
  %s17 = ssub.s32 1, %s15
  %s18 = scalar_select 0, %s17, %s15
  // Predicated region
  $region2: #{aff_forward.1} parent=0 // pred_check
    _
  $region3: #{aff_forward.1} parent=0 // pred_check_branch
    %20 = sbr.rel (0) target = $region5
  $region4: #{aff_forward.1} parent=0 // pred_region
    _
  $region5: #{aff_forward.1} parent=0 // pred_fallthru
    _
  // Predicated region
  $region6: #{aff_forward.1} parent=0 // pred_check
    _
  $region7: #{aff_forward.1} parent=0 // pred_check_branch
    %22 = sbr.rel (0) target = $region9
  $region8: #{aff_forward.1} parent=0 // pred_region
    _
  $region9: #{aff_forward.1} parent=0 // pred_fallthru
    _
  // Predicated region
  $region10: #{aff_forward.1} parent=0 // pred_check
    _
  $region11: #{aff_forward.1} parent=0 // pred_check_branch
    %24 = sbr.rel (0) target = $region13
  $region12: #{aff_forward.1} parent=0 // pred_region
    _
  $region13: #{aff_forward.1} parent=0 // pred_fallthru
    _
  // Predicated region
  $region14: #{aff_forward.1} parent=0 // pred_check
    _
  $region15: #{aff_forward.1} parent=0 // pred_check_branch
    %26 = sbr.rel (0) target = $region17
  $region16: #{aff_forward.1} parent=0 // pred_region
    _
  $region17: #{aff_forward.1} parent=0 // pred_fallthru
    _
  // Predicated region
  $region18: #{aff_forward.1} parent=0 // pred_check
    _
  $region19: #{aff_forward.1} parent=0 // pred_check_branch
    %28 = sbr.rel (0) target = $region21
  $region20: #{aff_forward.1} parent=0 // pred_region
    _
  $region21: #{aff_forward.1} parent=0 // pred_fallthru
    _
  // Predicated region
  $region22: #{aff_forward.1} parent=0 // pred_check
    _
  $region23: #{aff_forward.1} parent=0 // pred_check_branch
    %30 = sbr.rel (0) target = $region25
  $region24: #{aff_forward.1} parent=0 // pred_region
    _
  $region25: #{aff_forward.1} parent=0 // pred_fallthru
    _
  // Predicated region
  $region26: #{aff_forward.1} parent=0 // pred_check
    _
  $region27: #{aff_forward.1} parent=0 // pred_check_branch
    %32 = sbr.rel (0) target = $region29
  $region28: #{aff_forward.1} parent=0 // pred_region
    _
  $region29: #{aff_forward.1} parent=0 // pred_fallthru
    _
  // Predicated region
  $region30: #{aff_forward.1} parent=0 // pred_check
    _
  $region31: #{aff_forward.1} parent=0 // pred_check_branch
    %34 = sbr.rel (0) target = $region33
  $region32: #{aff_forward.1} parent=0 // pred_region
    _
  $region33: #{aff_forward.1} parent=0 // pred_fallthru
    _
  // Predicated region
  $region34: #{aff_forward.1} parent=0 // pred_check
    _
  $region35: #{aff_forward.1} parent=0 // pred_check_branch
    %36 = sbr.rel (0) target = $region37
  $region36: #{aff_forward.1} parent=0 // pred_region
    _
  $region37: #{aff_forward.1} parent=0 // pred_fallthru
    _
  // Predicated region
  $region38: #{aff_forward.1} parent=0 // pred_check
    _
  $region39: #{aff_forward.1} parent=0 // pred_check_branch
    %38 = sbr.rel (0) target = $region41
  $region40: #{aff_forward.1} parent=0 // pred_region
    _
  $region41: #{aff_forward.1} parent=0 // pred_fallthru
    _
  // Predicated region
  $region42: #{aff_forward.1} parent=0 // pred_check
    _
  $region43: #{aff_forward.1} parent=0 // pred_check_branch
    %40 = sbr.rel (0) target = $region45
  $region44: #{aff_forward.1} parent=0 // pred_region
    _
  $region45: #{aff_forward.1} parent=0 // pred_fallthru
    _
  // Predicated region
  $region46: #{aff_forward.1} parent=0 // pred_check
    _
  $region47: #{aff_forward.1} parent=0 // pred_check_branch
    %42 = sbr.rel (0) target = $region49
  $region48: #{aff_forward.1} parent=0 // pred_region
    _
  $region49: #{aff_forward.1} parent=0 // pred_fallthru
    _
  // Predicated region
  $region50: #{aff_forward.1} parent=0 // pred_check
    _
  $region51: #{aff_forward.1} parent=0 // pred_check_branch
    %44 = sbr.rel (0) target = $region53
  $region52: #{aff_forward.1} parent=0 // pred_region
    _
  $region53: #{aff_forward.1} parent=0 // pred_fallthru
    _
  // Predicated region
  $region54: #{aff_forward.1} parent=0 // pred_check
    _
  $region55: #{aff_forward.1} parent=0 // pred_check_branch
    %46 = sbr.rel (0) target = $region57
  $region56: #{aff_forward.1} parent=0 // pred_region
    _
  $region57: #{aff_forward.1} parent=0 // pred_fallthru
    _
  %v48 = vld [vmem:[%s0] sm:$0xff]
  %v49 = vld [vmem:[%s0 + $0x8] sm:$0xff]
  %v50 = vld [vmem:[%s0 + $0x10] sm:$0xff]
  %v51 = vld [vmem:[%s0 + $0x18] sm:$0xff]
  %v52 = vld [vmem:[%s0 + $0x20] sm:$0xff]
  %v53 = vld [vmem:[%s0 + $0x28] sm:$0xff]
  %v54 = vld [vmem:[%s0 + $0x30] sm:$0xff]
  %v55 = vld [vmem:[%s0 + $0x38] sm:$0xff]
  %v56 = vld [vmem:[%s0 + $0x40] sm:$0xff]
  %v57 = vld [vmem:[%s0 + $0x48] sm:$0xff]
  %v58 = vld [vmem:[%s0 + $0x50] sm:$0xff]
  %v59 = vld [vmem:[%s0 + $0x58] sm:$0xff]
  %v60 = vld [vmem:[%s0 + $0x60] sm:$0xff]
  %v61 = vld [vmem:[%s0 + $0x68] sm:$0xff]
  %v62 = vld [vmem:[%s0 + $0x70] sm:$0xff]
  %v63 = vld [vmem:[%s0 + $0x78] sm:$0xff]
  %v64 = vld [vmem:[%s1] sm:$0xff]
  %v65 = vld [vmem:[%s1 + $0x8] sm:$0xff]
  %v66 = vld [vmem:[%s1 + $0x10] sm:$0xff]
  %v67 = vld [vmem:[%s1 + $0x18] sm:$0xff]
  %v68 = vld [vmem:[%s1 + $0x20] sm:$0xff]
  %v69 = vld [vmem:[%s1 + $0x28] sm:$0xff]
  %v70 = vld [vmem:[%s1 + $0x30] sm:$0xff]
  %v71 = vld [vmem:[%s1 + $0x38] sm:$0xff]
  %v72 = vld [vmem:[%s1 + $0x40] sm:$0xff]
  %v73 = vld [vmem:[%s1 + $0x48] sm:$0xff]
  %v74 = vld [vmem:[%s1 + $0x50] sm:$0xff]
  %v75 = vld [vmem:[%s1 + $0x58] sm:$0xff]
  %v76 = vld [vmem:[%s1 + $0x60] sm:$0xff]
  %v77 = vld [vmem:[%s1 + $0x68] sm:$0xff]
  %v78 = vld [vmem:[%s1 + $0x70] sm:$0xff]
  %v79 = vld [vmem:[%s1 + $0x78] sm:$0xff]
  %v80 = vadd.f32 %v48, %v64
  %v81 = vadd.f32 %v49, %v65
  %v82 = vadd.f32 %v50, %v66
  %v83 = vadd.f32 %v51, %v67
  %v84 = vadd.f32 %v52, %v68
  %v85 = vadd.f32 %v53, %v69
  %v86 = vadd.f32 %v54, %v70
  %v87 = vadd.f32 %v55, %v71
  %v88 = vadd.f32 %v56, %v72
  %v89 = vadd.f32 %v57, %v73
  %v90 = vadd.f32 %v58, %v74
  %v91 = vadd.f32 %v59, %v75
  %v92 = vadd.f32 %v60, %v76
  %v93 = vadd.f32 %v61, %v77
  %v94 = vadd.f32 %v62, %v78
  %v95 = vadd.f32 %v63, %v79
  %v96 = vadd.f32 %v80, %v81
  %97 = vadd.xlane.f32.xlu0 %v96
  %v98 = vpop.xlane.xlu0 %97
  %v99 = vadd.f32 %v82, %v83
  %100 = vadd.xlane.f32.xlu0 %v99
  %v101 = vpop.xlane.xlu0 %100
  %v102 = vadd.f32 %v84, %v85
  %103 = vadd.xlane.f32.xlu0 %v102
  %v104 = vpop.xlane.xlu0 %103
  %v105 = vadd.f32 %v86, %v87
  %106 = vadd.xlane.f32.xlu0 %v105
  %v107 = vpop.xlane.xlu0 %106
  %v108 = vadd.f32 %v88, %v89
  %109 = vadd.xlane.f32.xlu0 %v108
  %v110 = vpop.xlane.xlu0 %109
  %v111 = vadd.f32 %v90, %v91
  %112 = vadd.xlane.f32.xlu0 %v111
  %v113 = vpop.xlane.xlu0 %112
  %v114 = vadd.f32 %v92, %v93
  %115 = vadd.xlane.f32.xlu0 %v114
  %v116 = vpop.xlane.xlu0 %115
  %v117 = vadd.f32 %v94, %v95
  %118 = vadd.xlane.f32.xlu0 %v117
  %v119 = vpop.xlane.xlu0 %118
  %v120 = vmul.f32 %v98, 0.00390625
  %v121 = vmul.f32 %v101, 0.00390625
  %v122 = vmul.f32 %v104, 0.00390625
  %v123 = vmul.f32 %v107, 0.00390625
  %v124 = vmul.f32 %v110, 0.00390625
  %v125 = vmul.f32 %v113, 0.00390625
  %v126 = vmul.f32 %v116, 0.00390625
  %v127 = vmul.f32 %v119, 0.00390625
  %v128 = vld [vmem:[%s6] sm:$0xff]
  %v129 = vld [vmem:[%s6 + $0x8] sm:$0xff]
  %v130 = vld [vmem:[%s6 + $0x10] sm:$0xff]
  %v131 = vld [vmem:[%s6 + $0x18] sm:$0xff]
  %v132 = vld [vmem:[%s6 + $0x20] sm:$0xff]
  %v133 = vld [vmem:[%s6 + $0x28] sm:$0xff]
  %v134 = vld [vmem:[%s6 + $0x30] sm:$0xff]
  %v135 = vld [vmem:[%s6 + $0x38] sm:$0xff]
  %v136 = vld [vmem:[%s7] sm:$0xff]
  %v137 = vld [vmem:[%s7 + $0x8] sm:$0xff]
  %v138 = vld [vmem:[%s7 + $0x10] sm:$0xff]
  %v139 = vld [vmem:[%s7 + $0x18] sm:$0xff]
  %v140 = vld [vmem:[%s7 + $0x20] sm:$0xff]
  %v141 = vld [vmem:[%s7 + $0x28] sm:$0xff]
  %v142 = vld [vmem:[%s7 + $0x30] sm:$0xff]
  %v143 = vld [vmem:[%s7 + $0x38] sm:$0xff]
  %145 = vset.pattern.permute.xlu0 0
  %146 = vperm.xlu0 %145, %v136
  %v147 = vpop.permute.xlu0 %146
  %150 = vset.pattern.permute.xlu0 0
  %151 = vperm.xlu0 %150, %v137
  %v152 = vpop.permute.xlu0 %151
  %155 = vset.pattern.permute.xlu0 0
  %156 = vperm.xlu0 %155, %v138
  %v157 = vpop.permute.xlu0 %156
  %160 = vset.pattern.permute.xlu0 0
  %161 = vperm.xlu0 %160, %v139
  %v162 = vpop.permute.xlu0 %161
  %165 = vset.pattern.permute.xlu0 0
  %166 = vperm.xlu0 %165, %v140
  %v167 = vpop.permute.xlu0 %166
  %170 = vset.pattern.permute.xlu0 0
  %171 = vperm.xlu0 %170, %v141
  %v172 = vpop.permute.xlu0 %171
  %175 = vset.pattern.permute.xlu0 0
  %176 = vperm.xlu0 %175, %v142
  %v177 = vpop.permute.xlu0 %176
  %180 = vset.pattern.permute.xlu0 0
  %181 = vperm.xlu0 %180, %v143
  %v182 = vpop.permute.xlu0 %181
  %vm184 = vcmask 523264
  %v186 = vsel %vm184, %v128, 0
  %v189 = vsel %vm184, %v129, 0
  %v192 = vsel %vm184, %v130, 0
  %v195 = vsel %vm184, %v131, 0
  %v198 = vsel %vm184, %v132, 0
  %v201 = vsel %vm184, %v133, 0
  %v204 = vsel %vm184, %v134, 0
  %v207 = vsel %vm184, %v135, 0
  %209 = vmatprep.subr.mxu0 0.0
  %210 = vmatpush1.msra.mxu0 %v120
  %211 = vmatprep.subr.mxu0 0.0
  %212 = vmatpush1.msra.mxu0 %v121
  %213 = vmatprep.subr.mxu0 0.0
  %214 = vmatpush1.msra.mxu0 %v122
  %215 = vmatprep.subr.mxu0 0.0
  %216 = vmatpush1.msra.mxu0 %v123
  %217 = vmatprep.subr.mxu0 0.0
  %218 = vmatpush1.msra.mxu0 %v124
  %219 = vmatprep.subr.mxu0 0.0
  %220 = vmatpush1.msra.mxu0 %v125
  %221 = vmatprep.subr.mxu0 0.0
  %222 = vmatpush1.msra.mxu0 %v126
  %223 = vmatprep.subr.mxu0 0.0
  %224 = vmatpush1.msra.mxu0 %v127
  %225 = vmatprep.subr.mxu0 0.0
  %226 = vmatpush1.msra.mxu0 0.0
  %227 = vmatprep.subr.mxu0 0.0
  %228 = vmatpush1.msra.mxu0 0.0
  %229 = vmatprep.subr.mxu0 0.0
  %230 = vmatpush1.msra.mxu0 0.0
  %231 = vmatprep.subr.mxu0 0.0
  %232 = vmatpush1.msra.mxu0 0.0
  %233 = vmatprep.subr.mxu0 0.0
  %234 = vmatpush1.msra.mxu0 0.0
  %235 = vmatprep.subr.mxu0 0.0
  %236 = vmatpush1.msra.mxu0 0.0
  %237 = vmatprep.subr.mxu0 0.0
  %238 = vmatpush1.msra.mxu0 0.0
  %239 = vmatprep.subr.mxu0 0.0
  %240 = vmatpush1.msra.mxu0 0.0
  %241 = vmatprep.subr.mxu0 0.0
  %242 = vmatpush1.msra.mxu0 0.0
  %243 = vmatprep.subr.mxu0 0.0
  %244 = vmatpush1.msra.mxu0 0.0
  %245 = vmatprep.subr.mxu0 0.0
  %246 = vmatpush1.msra.mxu0 0.0
  %247 = vmatprep.subr.mxu0 0.0
  %248 = vmatpush1.msra.mxu0 0.0
  %249 = vmatprep.subr.mxu0 0.0
  %250 = vmatpush1.msra.mxu0 0.0
  %251 = vmatprep.subr.mxu0 0.0
  %252 = vmatpush1.msra.mxu0 0.0
  %253 = vmatprep.subr.mxu0 0.0
  %254 = vmatpush1.msra.mxu0 0.0
  %255 = vmatprep.subr.mxu0 0.0
  %256 = vmatpush1.msra.mxu0 0.0
  %257 = vmatprep.subr.mxu0 0.0
  %258 = vmatpush1.msra.mxu0 0.0
  %259 = vmatprep.subr.mxu0 0.0
  %260 = vmatpush1.msra.mxu0 0.0
  %261 = vmatprep.subr.mxu0 0.0
  %262 = vmatpush1.msra.mxu0 0.0
  %263 = vmatprep.subr.mxu0 0.0
  %264 = vmatpush1.msra.mxu0 0.0
  %265 = vmatprep.subr.mxu0 0.0
  %266 = vmatpush1.msra.mxu0 0.0
  %267 = vmatprep.subr.mxu0 0.0
  %268 = vmatpush1.msra.mxu0 0.0
  %269 = vmatprep.subr.mxu0 0.0
  %270 = vmatpush1.msra.mxu0 0.0
  %271 = vmatprep.subr.mxu0 0.0
  %272 = vmatpush1.msra.mxu0 0.0
  %273 = vmatprep.mubr.f32.mxu0 0.0
  %274 = vmatmul.mubr.f32.gmra.mrb[0].mxu0 %v186
  %v275 = vpop.f32.mrb[0].mxu0
  %v276 = vadd.f32 %v147, %v275
  %v277 = vpop.f32.mrb[0].mxu0
  %278 = vmatprep.mubr.f32.mxu0 0.0
  %279 = vmatmul.mubr.f32.gmra.mrb[0].mxu0 %v189
  %v280 = vpop.f32.mrb[0].mxu0
  %v281 = vadd.f32 %v152, %v280
  %v282 = vpop.f32.mrb[0].mxu0
  %283 = vmatprep.mubr.f32.mxu0 0.0
  %284 = vmatmul.mubr.f32.gmra.mrb[0].mxu0 %v192
  %v285 = vpop.f32.mrb[0].mxu0
  %v286 = vadd.f32 %v157, %v285
  %v287 = vpop.f32.mrb[0].mxu0
  %288 = vmatprep.mubr.f32.mxu0 0.0
  %289 = vmatmul.mubr.f32.gmra.mrb[0].mxu0 %v195
  %v290 = vpop.f32.mrb[0].mxu0
  %v291 = vadd.f32 %v162, %v290
  %v292 = vpop.f32.mrb[0].mxu0
  %293 = vmatprep.mubr.f32.mxu0 0.0
  %294 = vmatmul.mubr.f32.gmra.mrb[0].mxu0 %v198
  %v295 = vpop.f32.mrb[0].mxu0
  %v296 = vadd.f32 %v167, %v295
  %v297 = vpop.f32.mrb[0].mxu0
  %298 = vmatprep.mubr.f32.mxu0 0.0
  %299 = vmatmul.mubr.f32.gmra.mrb[0].mxu0 %v201
  %v300 = vpop.f32.mrb[0].mxu0
  %v301 = vadd.f32 %v172, %v300
  %v302 = vpop.f32.mrb[0].mxu0
  %303 = vmatprep.mubr.f32.mxu0 0.0
  %304 = vmatmul.mubr.f32.gmra.mrb[0].mxu0 %v204
  %v305 = vpop.f32.mrb[0].mxu0
  %v306 = vadd.f32 %v177, %v305
  %v307 = vpop.f32.mrb[0].mxu0
  %308 = vmatprep.mubr.f32.mxu0 0.0
  %309 = vmatmul.mubr.f32.gmra.mrb[0].mxu0 %v207
  %v310 = vpop.f32.mrb[0].mxu0
  %v311 = vadd.f32 %v182, %v310
  %v312 = vpop.f32.mrb[0].mxu0
  %313 = vdwg.mxu0
  %v314 = vadd.f32 %v276, %v281
  %v315 = vadd.f32 %v314, %v286
  %v316 = vadd.f32 %v315, %v291
  %v317 = vadd.f32 %v316, %v296
  %v318 = vadd.f32 %v317, %v301
  %v319 = vadd.f32 %v318, %v306
  %v320 = vadd.f32 %v319, %v311
  %v321 = vrot.slane %v320, 4
  %v322 = vadd.f32 %v320, %v321
  %v323 = vrot.slane %v322, 2
  %v324 = vadd.f32 %v322, %v323
  %v325 = vrot.slane %v324, 1
  %v326 = vadd.f32 %v324, %v325
  %v327 = vrcp.pop 64.0
  %v328 = vmul.f32 %v326, %v327
  %v329 = vsub.f32 %v276, %v328
  %v330 = vsub.f32 %v281, %v328
  %v331 = vsub.f32 %v286, %v328
  %v332 = vsub.f32 %v291, %v328
  %v333 = vsub.f32 %v296, %v328
  %v334 = vsub.f32 %v301, %v328
  %v335 = vsub.f32 %v306, %v328
  %v336 = vsub.f32 %v311, %v328
  %v337 = vmul.f32 %v329, %v329
  %v338 = vmul.f32 %v330, %v330
  %v339 = vmul.f32 %v331, %v331
  %v340 = vmul.f32 %v332, %v332
  %v341 = vmul.f32 %v333, %v333
  %v342 = vmul.f32 %v334, %v334
  %v343 = vmul.f32 %v335, %v335
  %v344 = vmul.f32 %v336, %v336
  %v345 = vadd.f32 %v337, %v338
  %v346 = vadd.f32 %v345, %v339
  %v347 = vadd.f32 %v346, %v340
  %v348 = vadd.f32 %v347, %v341
  %v349 = vadd.f32 %v348, %v342
  %v350 = vadd.f32 %v349, %v343
  %v351 = vadd.f32 %v350, %v344
  %v352 = vrot.slane %v351, 4
  %v353 = vadd.f32 %v351, %v352
  %v354 = vrot.slane %v353, 2
  %v355 = vadd.f32 %v353, %v354
  %v356 = vrot.slane %v355, 1
  %v357 = vadd.f32 %v355, %v356
  %v358 = vmul.f32 %v357, %v327
  %v359 = vadd.f32 %v358, 1e-05
  %v360 = vrsqrt.pop %v359
  %v361 = vmul.f32 %v329, %v360
  %v362 = vmul.f32 %v330, %v360
  %v363 = vmul.f32 %v331, %v360
  %v364 = vmul.f32 %v332, %v360
  %v365 = vmul.f32 %v333, %v360
  %v366 = vmul.f32 %v334, %v360
  %v367 = vmul.f32 %v335, %v360
  %v368 = vmul.f32 %v336, %v360
  %v369 = vld [vmem:[%s8] sm:$0xff]
  %v370 = vld [vmem:[%s8 + $0x8] sm:$0xff]
  %v371 = vld [vmem:[%s8 + $0x10] sm:$0xff]
  %v372 = vld [vmem:[%s8 + $0x18] sm:$0xff]
  %v373 = vld [vmem:[%s8 + $0x20] sm:$0xff]
  %v374 = vld [vmem:[%s8 + $0x28] sm:$0xff]
  %v375 = vld [vmem:[%s8 + $0x30] sm:$0xff]
  %v376 = vld [vmem:[%s8 + $0x38] sm:$0xff]
  %378 = vset.pattern.permute.xlu0 0
  %379 = vperm.xlu0 %378, %v369
  %v380 = vpop.permute.xlu0 %379
  %383 = vset.pattern.permute.xlu0 0
  %384 = vperm.xlu0 %383, %v370
  %v385 = vpop.permute.xlu0 %384
  %388 = vset.pattern.permute.xlu0 0
  %389 = vperm.xlu0 %388, %v371
  %v390 = vpop.permute.xlu0 %389
  %393 = vset.pattern.permute.xlu0 0
  %394 = vperm.xlu0 %393, %v372
  %v395 = vpop.permute.xlu0 %394
  %398 = vset.pattern.permute.xlu0 0
  %399 = vperm.xlu0 %398, %v373
  %v400 = vpop.permute.xlu0 %399
  %403 = vset.pattern.permute.xlu0 0
  %404 = vperm.xlu0 %403, %v374
  %v405 = vpop.permute.xlu0 %404
  %408 = vset.pattern.permute.xlu0 0
  %409 = vperm.xlu0 %408, %v375
  %v410 = vpop.permute.xlu0 %409
  %413 = vset.pattern.permute.xlu0 0
  %414 = vperm.xlu0 %413, %v376
  %v415 = vpop.permute.xlu0 %414
  %v417 = vmul.f32 %v361, %v380
  %v418 = vmul.f32 %v362, %v385
  %v419 = vmul.f32 %v363, %v390
  %v420 = vmul.f32 %v364, %v395
  %v421 = vmul.f32 %v365, %v400
  %v422 = vmul.f32 %v366, %v405
  %v423 = vmul.f32 %v367, %v410
  %v424 = vmul.f32 %v368, %v415
  %v425 = vld [vmem:[%s9] sm:$0xff]
  %v426 = vld [vmem:[%s9 + $0x8] sm:$0xff]
  %v427 = vld [vmem:[%s9 + $0x10] sm:$0xff]
  %v428 = vld [vmem:[%s9 + $0x18] sm:$0xff]
  %v429 = vld [vmem:[%s9 + $0x20] sm:$0xff]
  %v430 = vld [vmem:[%s9 + $0x28] sm:$0xff]
  %v431 = vld [vmem:[%s9 + $0x30] sm:$0xff]
  %v432 = vld [vmem:[%s9 + $0x38] sm:$0xff]
  %434 = vset.pattern.permute.xlu0 0
  %435 = vperm.xlu0 %434, %v425
  %v436 = vpop.permute.xlu0 %435
  %439 = vset.pattern.permute.xlu0 0
  %440 = vperm.xlu0 %439, %v426
  %v441 = vpop.permute.xlu0 %440
  %444 = vset.pattern.permute.xlu0 0
  %445 = vperm.xlu0 %444, %v427
  %v446 = vpop.permute.xlu0 %445
  %449 = vset.pattern.permute.xlu0 0
  %450 = vperm.xlu0 %449, %v428
  %v451 = vpop.permute.xlu0 %450
  %454 = vset.pattern.permute.xlu0 0
  %455 = vperm.xlu0 %454, %v429
  %v456 = vpop.permute.xlu0 %455
  %459 = vset.pattern.permute.xlu0 0
  %460 = vperm.xlu0 %459, %v430
  %v461 = vpop.permute.xlu0 %460
  %464 = vset.pattern.permute.xlu0 0
  %465 = vperm.xlu0 %464, %v431
  %v466 = vpop.permute.xlu0 %465
  %469 = vset.pattern.permute.xlu0 0
  %470 = vperm.xlu0 %469, %v432
  %v471 = vpop.permute.xlu0 %470
  %v473 = vadd.f32 %v417, %v436
  %v474 = vadd.f32 %v418, %v441
  %v475 = vadd.f32 %v419, %v446
  %v476 = vadd.f32 %v420, %v451
  %v477 = vadd.f32 %v421, %v456
  %v478 = vadd.f32 %v422, %v461
  %v479 = vadd.f32 %v423, %v466
  %v480 = vadd.f32 %v424, %v471
  %v481 = vmax.f32 %v473, 0.0
  %v482 = vmax.f32 %v474, 0.0
  %v483 = vmax.f32 %v475, 0.0
  %v484 = vmax.f32 %v476, 0.0
  %v485 = vmax.f32 %v477, 0.0
  %v486 = vmax.f32 %v478, 0.0
  %v487 = vmax.f32 %v479, 0.0
  %v488 = vmax.f32 %v480, 0.0
  %v489 = vld [vmem:[%s10] sm:$0xff]
  %v490 = vld [vmem:[%s10 + $0x8] sm:$0xff]
  %v491 = vld [vmem:[%s10 + $0x10] sm:$0xff]
  %v492 = vld [vmem:[%s10 + $0x18] sm:$0xff]
  %v493 = vld [vmem:[%s10 + $0x20] sm:$0xff]
  %v494 = vld [vmem:[%s10 + $0x28] sm:$0xff]
  %v495 = vld [vmem:[%s10 + $0x30] sm:$0xff]
  %v496 = vld [vmem:[%s10 + $0x38] sm:$0xff]
  %v497 = vld [vmem:[%s11] sm:$0xff]
  %v498 = vld [vmem:[%s11 + $0x8] sm:$0xff]
  %v499 = vld [vmem:[%s11 + $0x10] sm:$0xff]
  %v500 = vld [vmem:[%s11 + $0x18] sm:$0xff]
  %v501 = vld [vmem:[%s11 + $0x20] sm:$0xff]
  %v502 = vld [vmem:[%s11 + $0x28] sm:$0xff]
  %v503 = vld [vmem:[%s11 + $0x30] sm:$0xff]
  %v504 = vld [vmem:[%s11 + $0x38] sm:$0xff]
  %506 = vset.pattern.permute.xlu0 0
  %507 = vperm.xlu0 %506, %v497
  %v508 = vpop.permute.xlu0 %507
  %511 = vset.pattern.permute.xlu0 0
  %512 = vperm.xlu0 %511, %v498
  %v513 = vpop.permute.xlu0 %512
  %516 = vset.pattern.permute.xlu0 0
  %517 = vperm.xlu0 %516, %v499
  %v518 = vpop.permute.xlu0 %517
  %521 = vset.pattern.permute.xlu0 0
  %522 = vperm.xlu0 %521, %v500
  %v523 = vpop.permute.xlu0 %522
  %526 = vset.pattern.permute.xlu0 0
  %527 = vperm.xlu0 %526, %v501
  %v528 = vpop.permute.xlu0 %527
  %531 = vset.pattern.permute.xlu0 0
  %532 = vperm.xlu0 %531, %v502
  %v533 = vpop.permute.xlu0 %532
  %536 = vset.pattern.permute.xlu0 0
  %537 = vperm.xlu0 %536, %v503
  %v538 = vpop.permute.xlu0 %537
  %541 = vset.pattern.permute.xlu0 0
  %542 = vperm.xlu0 %541, %v504
  %v543 = vpop.permute.xlu0 %542
  %v546 = vsel %vm184, %v489, 0
  %v549 = vsel %vm184, %v490, 0
  %v552 = vsel %vm184, %v491, 0
  %v555 = vsel %vm184, %v492, 0
  %v558 = vsel %vm184, %v493, 0
  %v561 = vsel %vm184, %v494, 0
  %v564 = vsel %vm184, %v495, 0
  %v567 = vsel %vm184, %v496, 0
  %569 = vmatprep.subr.mxu0 0.0
  %570 = vmatpush1.msra.mxu0 %v481
  %571 = vmatprep.subr.mxu0 0.0
  %572 = vmatpush1.msra.mxu0 %v482
  %573 = vmatprep.subr.mxu0 0.0
  %574 = vmatpush1.msra.mxu0 %v483
  %575 = vmatprep.subr.mxu0 0.0
  %576 = vmatpush1.msra.mxu0 %v484
  %577 = vmatprep.subr.mxu0 0.0
  %578 = vmatpush1.msra.mxu0 %v485
  %579 = vmatprep.subr.mxu0 0.0
  %580 = vmatpush1.msra.mxu0 %v486
  %581 = vmatprep.subr.mxu0 0.0
  %582 = vmatpush1.msra.mxu0 %v487
  %583 = vmatprep.subr.mxu0 0.0
  %584 = vmatpush1.msra.mxu0 %v488
  %585 = vmatprep.subr.mxu0 0.0
  %586 = vmatpush1.msra.mxu0 0.0
  %587 = vmatprep.subr.mxu0 0.0
  %588 = vmatpush1.msra.mxu0 0.0
  %589 = vmatprep.subr.mxu0 0.0
  %590 = vmatpush1.msra.mxu0 0.0
  %591 = vmatprep.subr.mxu0 0.0
  %592 = vmatpush1.msra.mxu0 0.0
  %593 = vmatprep.subr.mxu0 0.0
  %594 = vmatpush1.msra.mxu0 0.0
  %595 = vmatprep.subr.mxu0 0.0
  %596 = vmatpush1.msra.mxu0 0.0
  %597 = vmatprep.subr.mxu0 0.0
  %598 = vmatpush1.msra.mxu0 0.0
  %599 = vmatprep.subr.mxu0 0.0
  %600 = vmatpush1.msra.mxu0 0.0
  %601 = vmatprep.subr.mxu0 0.0
  %602 = vmatpush1.msra.mxu0 0.0
  %603 = vmatprep.subr.mxu0 0.0
  %604 = vmatpush1.msra.mxu0 0.0
  %605 = vmatprep.subr.mxu0 0.0
  %606 = vmatpush1.msra.mxu0 0.0
  %607 = vmatprep.subr.mxu0 0.0
  %608 = vmatpush1.msra.mxu0 0.0
  %609 = vmatprep.subr.mxu0 0.0
  %610 = vmatpush1.msra.mxu0 0.0
  %611 = vmatprep.subr.mxu0 0.0
  %612 = vmatpush1.msra.mxu0 0.0
  %613 = vmatprep.subr.mxu0 0.0
  %614 = vmatpush1.msra.mxu0 0.0
  %615 = vmatprep.subr.mxu0 0.0
  %616 = vmatpush1.msra.mxu0 0.0
  %617 = vmatprep.subr.mxu0 0.0
  %618 = vmatpush1.msra.mxu0 0.0
  %619 = vmatprep.subr.mxu0 0.0
  %620 = vmatpush1.msra.mxu0 0.0
  %621 = vmatprep.subr.mxu0 0.0
  %622 = vmatpush1.msra.mxu0 0.0
  %623 = vmatprep.subr.mxu0 0.0
  %624 = vmatpush1.msra.mxu0 0.0
  %625 = vmatprep.subr.mxu0 0.0
  %626 = vmatpush1.msra.mxu0 0.0
  %627 = vmatprep.subr.mxu0 0.0
  %628 = vmatpush1.msra.mxu0 0.0
  %629 = vmatprep.subr.mxu0 0.0
  %630 = vmatpush1.msra.mxu0 0.0
  %631 = vmatprep.subr.mxu0 0.0
  %632 = vmatpush1.msra.mxu0 0.0
  %633 = vmatprep.mubr.f32.mxu0 0.0
  %634 = vmatmul.mubr.f32.gmra.mrb[0].mxu0 %v546
  %v635 = vpop.f32.mrb[0].mxu0
  %v636 = vadd.f32 %v508, %v635
  %v637 = vpop.f32.mrb[0].mxu0
  %638 = vmatprep.mubr.f32.mxu0 0.0
  %639 = vmatmul.mubr.f32.gmra.mrb[0].mxu0 %v549
  %v640 = vpop.f32.mrb[0].mxu0
  %v641 = vadd.f32 %v513, %v640
  %v642 = vpop.f32.mrb[0].mxu0
  %643 = vmatprep.mubr.f32.mxu0 0.0
  %644 = vmatmul.mubr.f32.gmra.mrb[0].mxu0 %v552
  %v645 = vpop.f32.mrb[0].mxu0
  %v646 = vadd.f32 %v518, %v645
  %v647 = vpop.f32.mrb[0].mxu0
  %648 = vmatprep.mubr.f32.mxu0 0.0
  %649 = vmatmul.mubr.f32.gmra.mrb[0].mxu0 %v555
  %v650 = vpop.f32.mrb[0].mxu0
  %v651 = vadd.f32 %v523, %v650
  %v652 = vpop.f32.mrb[0].mxu0
  %653 = vmatprep.mubr.f32.mxu0 0.0
  %654 = vmatmul.mubr.f32.gmra.mrb[0].mxu0 %v558
  %v655 = vpop.f32.mrb[0].mxu0
  %v656 = vadd.f32 %v528, %v655
  %v657 = vpop.f32.mrb[0].mxu0
  %658 = vmatprep.mubr.f32.mxu0 0.0
  %659 = vmatmul.mubr.f32.gmra.mrb[0].mxu0 %v561
  %v660 = vpop.f32.mrb[0].mxu0
  %v661 = vadd.f32 %v533, %v660
  %v662 = vpop.f32.mrb[0].mxu0
  %663 = vmatprep.mubr.f32.mxu0 0.0
  %664 = vmatmul.mubr.f32.gmra.mrb[0].mxu0 %v564
  %v665 = vpop.f32.mrb[0].mxu0
  %v666 = vadd.f32 %v538, %v665
  %v667 = vpop.f32.mrb[0].mxu0
  %668 = vmatprep.mubr.f32.mxu0 0.0
  %669 = vmatmul.mubr.f32.gmra.mrb[0].mxu0 %v567
  %v670 = vpop.f32.mrb[0].mxu0
  %v671 = vadd.f32 %v543, %v670
  %v672 = vpop.f32.mrb[0].mxu0
  %673 = vdwg.mxu0
  %v674 = vadd.f32 %v636, %v641
  %v675 = vadd.f32 %v674, %v646
  %v676 = vadd.f32 %v675, %v651
  %v677 = vadd.f32 %v676, %v656
  %v678 = vadd.f32 %v677, %v661
  %v679 = vadd.f32 %v678, %v666
  %v680 = vadd.f32 %v679, %v671
  %v681 = vrot.slane %v680, 4
  %v682 = vadd.f32 %v680, %v681
  %v683 = vrot.slane %v682, 2
  %v684 = vadd.f32 %v682, %v683
  %v685 = vrot.slane %v684, 1
  %v686 = vadd.f32 %v684, %v685
  %v687 = vmul.f32 %v686, %v327
  %v688 = vsub.f32 %v636, %v687
  %v689 = vsub.f32 %v641, %v687
  %v690 = vsub.f32 %v646, %v687
  %v691 = vsub.f32 %v651, %v687
  %v692 = vsub.f32 %v656, %v687
  %v693 = vsub.f32 %v661, %v687
  %v694 = vsub.f32 %v666, %v687
  %v695 = vsub.f32 %v671, %v687
  %v696 = vmul.f32 %v688, %v688
  %v697 = vmul.f32 %v689, %v689
  %v698 = vmul.f32 %v690, %v690
  %v699 = vmul.f32 %v691, %v691
  %v700 = vmul.f32 %v692, %v692
  %v701 = vmul.f32 %v693, %v693
  %v702 = vmul.f32 %v694, %v694
  %v703 = vmul.f32 %v695, %v695
  %v704 = vadd.f32 %v696, %v697
  %v705 = vadd.f32 %v704, %v698
  %v706 = vadd.f32 %v705, %v699
  %v707 = vadd.f32 %v706, %v700
  %v708 = vadd.f32 %v707, %v701
  %v709 = vadd.f32 %v708, %v702
  %v710 = vadd.f32 %v709, %v703
  %v711 = vrot.slane %v710, 4
  %v712 = vadd.f32 %v710, %v711
  %v713 = vrot.slane %v712, 2
  %v714 = vadd.f32 %v712, %v713
  %v715 = vrot.slane %v714, 1
  %v716 = vadd.f32 %v714, %v715
  %v717 = vmul.f32 %v716, %v327
  %v718 = vadd.f32 %v717, 1e-05
  %v719 = vrsqrt.pop %v718
  %v720 = vmul.f32 %v688, %v719
  %v721 = vmul.f32 %v689, %v719
  %v722 = vmul.f32 %v690, %v719
  %v723 = vmul.f32 %v691, %v719
  %v724 = vmul.f32 %v692, %v719
  %v725 = vmul.f32 %v693, %v719
  %v726 = vmul.f32 %v694, %v719
  %v727 = vmul.f32 %v695, %v719
  %v728 = vld [vmem:[%s12] sm:$0xff]
  %v729 = vld [vmem:[%s12 + $0x8] sm:$0xff]
  %v730 = vld [vmem:[%s12 + $0x10] sm:$0xff]
  %v731 = vld [vmem:[%s12 + $0x18] sm:$0xff]
  %v732 = vld [vmem:[%s12 + $0x20] sm:$0xff]
  %v733 = vld [vmem:[%s12 + $0x28] sm:$0xff]
  %v734 = vld [vmem:[%s12 + $0x30] sm:$0xff]
  %v735 = vld [vmem:[%s12 + $0x38] sm:$0xff]
  %737 = vset.pattern.permute.xlu0 0
  %738 = vperm.xlu0 %737, %v728
  %v739 = vpop.permute.xlu0 %738
  %742 = vset.pattern.permute.xlu0 0
  %743 = vperm.xlu0 %742, %v729
  %v744 = vpop.permute.xlu0 %743
  %747 = vset.pattern.permute.xlu0 0
  %748 = vperm.xlu0 %747, %v730
  %v749 = vpop.permute.xlu0 %748
  %752 = vset.pattern.permute.xlu0 0
  %753 = vperm.xlu0 %752, %v731
  %v754 = vpop.permute.xlu0 %753
  %757 = vset.pattern.permute.xlu0 0
  %758 = vperm.xlu0 %757, %v732
  %v759 = vpop.permute.xlu0 %758
  %762 = vset.pattern.permute.xlu0 0
  %763 = vperm.xlu0 %762, %v733
  %v764 = vpop.permute.xlu0 %763
  %767 = vset.pattern.permute.xlu0 0
  %768 = vperm.xlu0 %767, %v734
  %v769 = vpop.permute.xlu0 %768
  %772 = vset.pattern.permute.xlu0 0
  %773 = vperm.xlu0 %772, %v735
  %v774 = vpop.permute.xlu0 %773
  %v776 = vmul.f32 %v720, %v739
  %v777 = vmul.f32 %v721, %v744
  %v778 = vmul.f32 %v722, %v749
  %v779 = vmul.f32 %v723, %v754
  %v780 = vmul.f32 %v724, %v759
  %v781 = vmul.f32 %v725, %v764
  %v782 = vmul.f32 %v726, %v769
  %v783 = vmul.f32 %v727, %v774
  %v784 = vld [vmem:[%s13] sm:$0xff]
  %v785 = vld [vmem:[%s13 + $0x8] sm:$0xff]
  %v786 = vld [vmem:[%s13 + $0x10] sm:$0xff]
  %v787 = vld [vmem:[%s13 + $0x18] sm:$0xff]
  %v788 = vld [vmem:[%s13 + $0x20] sm:$0xff]
  %v789 = vld [vmem:[%s13 + $0x28] sm:$0xff]
  %v790 = vld [vmem:[%s13 + $0x30] sm:$0xff]
  %v791 = vld [vmem:[%s13 + $0x38] sm:$0xff]
  %793 = vset.pattern.permute.xlu0 0
  %794 = vperm.xlu0 %793, %v784
  %v795 = vpop.permute.xlu0 %794
  %798 = vset.pattern.permute.xlu0 0
  %799 = vperm.xlu0 %798, %v785
  %v800 = vpop.permute.xlu0 %799
  %803 = vset.pattern.permute.xlu0 0
  %804 = vperm.xlu0 %803, %v786
  %v805 = vpop.permute.xlu0 %804
  %808 = vset.pattern.permute.xlu0 0
  %809 = vperm.xlu0 %808, %v787
  %v810 = vpop.permute.xlu0 %809
  %813 = vset.pattern.permute.xlu0 0
  %814 = vperm.xlu0 %813, %v788
  %v815 = vpop.permute.xlu0 %814
  %818 = vset.pattern.permute.xlu0 0
  %819 = vperm.xlu0 %818, %v789
  %v820 = vpop.permute.xlu0 %819
  %823 = vset.pattern.permute.xlu0 0
  %824 = vperm.xlu0 %823, %v790
  %v825 = vpop.permute.xlu0 %824
  %828 = vset.pattern.permute.xlu0 0
  %829 = vperm.xlu0 %828, %v791
  %v830 = vpop.permute.xlu0 %829
  %v832 = vadd.f32 %v776, %v795
  %v833 = vadd.f32 %v777, %v800
  %v834 = vadd.f32 %v778, %v805
  %v835 = vadd.f32 %v779, %v810
  %v836 = vadd.f32 %v780, %v815
  %v837 = vadd.f32 %v781, %v820
  %v838 = vadd.f32 %v782, %v825
  %v839 = vadd.f32 %v783, %v830
  %v840 = vld [vmem:[%s2] sm:$0xf]
  %v841 = vld [vmem:[%s2 + $0x4] sm:$0xf]
  %v842 = vld [vmem:[%s2 + $0x8] sm:$0xf]
  %v843 = vld [vmem:[%s2 + $0xc] sm:$0xf]
  %v844 = vld [vmem:[%s2 + $0x10] sm:$0xf]
  %v845 = vld [vmem:[%s2 + $0x14] sm:$0xf]
  %v846 = vld [vmem:[%s2 + $0x18] sm:$0xf]
  %v847 = vld [vmem:[%s2 + $0x1c] sm:$0xf]
  %v848 = vpack.c.bf16 %v82, %v80
  %v849 = vpack.c.bf16 %v83, %v81
  %v850 = vpack.c.bf16 %v86, %v84
  %v851 = vpack.c.bf16 %v87, %v85
  %v852 = vpack.c.bf16 %v90, %v88
  %v853 = vpack.c.bf16 %v91, %v89
  %v854 = vpack.c.bf16 %v94, %v92
  %v855 = vpack.c.bf16 %v95, %v93
  %v856 = vld [vmem:[%s3] sm:$0xff]
  %v857 = vld [vmem:[%s3 + $0x8] sm:$0xff]
  %v858 = vld [vmem:[%s3 + $0x10] sm:$0xff]
  %v859 = vld [vmem:[%s3 + $0x18] sm:$0xff]
  %v860 = vld [vmem:[%s3 + $0x20] sm:$0xff]
  %v861 = vld [vmem:[%s3 + $0x28] sm:$0xff]
  %v862 = vld [vmem:[%s3 + $0x30] sm:$0xff]
  %v863 = vld [vmem:[%s3 + $0x38] sm:$0xff]
  %865 = vset.pattern.permute.xlu0 0
  %866 = vperm.xlu0 %865, %v856
  %v867 = vpop.permute.xlu0 %866
  %870 = vset.pattern.permute.xlu0 0
  %871 = vperm.xlu0 %870, %v857
  %v872 = vpop.permute.xlu0 %871
  %875 = vset.pattern.permute.xlu0 0
  %876 = vperm.xlu0 %875, %v858
  %v877 = vpop.permute.xlu0 %876
  %880 = vset.pattern.permute.xlu0 0
  %881 = vperm.xlu0 %880, %v859
  %v882 = vpop.permute.xlu0 %881
  %885 = vset.pattern.permute.xlu0 0
  %886 = vperm.xlu0 %885, %v860
  %v887 = vpop.permute.xlu0 %886
  %890 = vset.pattern.permute.xlu0 0
  %891 = vperm.xlu0 %890, %v861
  %v892 = vpop.permute.xlu0 %891
  %895 = vset.pattern.permute.xlu0 0
  %896 = vperm.xlu0 %895, %v862
  %v897 = vpop.permute.xlu0 %896
  %900 = vset.pattern.permute.xlu0 0
  %901 = vperm.xlu0 %900, %v863
  %v902 = vpop.permute.xlu0 %901
  %v912 = vunpack.c.l.b16 %v840
  %v913 = vunpack.c.l.b16 %v841
  %v914 = vunpack.c.l.b16 %v842
  %v915 = vunpack.c.l.b16 %v843
  %v916 = vunpack.c.l.b16 %v844
  %v917 = vunpack.c.l.b16 %v845
  %v918 = vunpack.c.l.b16 %v846
  %v919 = vunpack.c.l.b16 %v847
  %v920 = vpack.c.b16 %v913, %v912
  %v921 = vpack.c.b16 %v915, %v914
  %v922 = vpack.c.b16 %v917, %v916
  %v923 = vpack.c.b16 %v919, %v918
  %v925 = vsel %vm184, %v920, 0
  %v928 = vsel %vm184, %v921, 0
  %v931 = vsel %vm184, %v922, 0
  %v934 = vsel %vm184, %v923, 0
  %936 = vmatprep.subr.bf16.mxu0 %v849
  %937 = vmatpush1.bf16.msra.mxu0 %v848
  %938 = vmatprep.subr.bf16.mxu0 %v851
  %939 = vmatpush1.bf16.msra.mxu0 %v850
  %940 = vmatprep.subr.bf16.mxu0 %v853
  %941 = vmatpush1.bf16.msra.mxu0 %v852
  %942 = vmatprep.subr.bf16.mxu0 %v855
  %943 = vmatpush1.bf16.msra.mxu0 %v854
  %944 = vmatprep.subr.bf16.mxu0 0
  %945 = vmatpush1.bf16.msra.mxu0 0
  %946 = vmatprep.subr.bf16.mxu0 0
  %947 = vmatpush1.bf16.msra.mxu0 0
  %948 = vmatprep.subr.bf16.mxu0 0
  %949 = vmatpush1.bf16.msra.mxu0 0
  %950 = vmatprep.subr.bf16.mxu0 0
  %951 = vmatpush1.bf16.msra.mxu0 0
  %952 = vmatprep.subr.bf16.mxu0 0
  %953 = vmatpush1.bf16.msra.mxu0 0
  %954 = vmatprep.subr.bf16.mxu0 0
  %955 = vmatpush1.bf16.msra.mxu0 0
  %956 = vmatprep.subr.bf16.mxu0 0
  %957 = vmatpush1.bf16.msra.mxu0 0
  %958 = vmatprep.subr.bf16.mxu0 0
  %959 = vmatpush1.bf16.msra.mxu0 0
  %960 = vmatprep.subr.bf16.mxu0 0
  %961 = vmatpush1.bf16.msra.mxu0 0
  %962 = vmatprep.subr.bf16.mxu0 0
  %963 = vmatpush1.bf16.msra.mxu0 0
  %964 = vmatprep.subr.bf16.mxu0 0
  %965 = vmatpush1.bf16.msra.mxu0 0
  %966 = vmatprep.subr.bf16.mxu0 0
  %967 = vmatpush1.bf16.msra.mxu0 0
  %968 = vmatprep.mubr.bf16.mxu0 0
  %969 = vmatmul.mubr.bf16.gmra.mrb[0].mxu0 %v925
  %v970 = vpop.f32.mrb[0].mxu0
  %v971 = vadd.f32 %v867, %v970
  %v972 = vpop.f32.mrb[0].mxu0
  %v973 = vadd.f32 %v867, %v972
  %v974 = vpop.f32.mrb[0].mxu0
  %v975 = vadd.f32 %v872, %v974
  %v976 = vpop.f32.mrb[0].mxu0
  %v977 = vadd.f32 %v872, %v976
  %978 = vmatprep.mubr.bf16.mxu0 0
  %979 = vmatmul.mubr.bf16.gmra.mrb[0].mxu0 %v928
  %v980 = vpop.f32.mrb[0].mxu0
  %v981 = vadd.f32 %v877, %v980
  %v982 = vpop.f32.mrb[0].mxu0
  %v983 = vadd.f32 %v877, %v982
  %v984 = vpop.f32.mrb[0].mxu0
  %v985 = vadd.f32 %v882, %v984
  %v986 = vpop.f32.mrb[0].mxu0
  %v987 = vadd.f32 %v882, %v986
  %988 = vmatprep.mubr.bf16.mxu0 0
  %989 = vmatmul.mubr.bf16.gmra.mrb[0].mxu0 %v931
  %v990 = vpop.f32.mrb[0].mxu0
  %v991 = vadd.f32 %v887, %v990
  %v992 = vpop.f32.mrb[0].mxu0
  %v993 = vadd.f32 %v887, %v992
  %v994 = vpop.f32.mrb[0].mxu0
  %v995 = vadd.f32 %v892, %v994
  %v996 = vpop.f32.mrb[0].mxu0
  %v997 = vadd.f32 %v892, %v996
  %998 = vmatprep.mubr.bf16.mxu0 0
  %999 = vmatmul.mubr.bf16.gmra.mrb[0].mxu0 %v934
  %v1000 = vpop.f32.mrb[0].mxu0
  %v1001 = vadd.f32 %v897, %v1000
  %v1002 = vpop.f32.mrb[0].mxu0
  %v1003 = vadd.f32 %v897, %v1002
  %v1004 = vpop.f32.mrb[0].mxu0
  %v1005 = vadd.f32 %v902, %v1004
  %v1006 = vpop.f32.mrb[0].mxu0
  %v1007 = vadd.f32 %v902, %v1006
  %1008 = vdwg.mxu0
  %v1009 = vmax.f32 %v971, 0.0
  %v1010 = vmax.f32 %v973, 0.0
  %v1011 = vmax.f32 %v975, 0.0
  %v1012 = vmax.f32 %v977, 0.0
  %v1013 = vmax.f32 %v981, 0.0
  %v1014 = vmax.f32 %v983, 0.0
  %v1015 = vmax.f32 %v985, 0.0
  %v1016 = vmax.f32 %v987, 0.0
  %v1017 = vmax.f32 %v991, 0.0
  %v1018 = vmax.f32 %v993, 0.0
  %v1019 = vmax.f32 %v995, 0.0
  %v1020 = vmax.f32 %v997, 0.0
  %v1021 = vmax.f32 %v1001, 0.0
  %v1022 = vmax.f32 %v1003, 0.0
  %v1023 = vmax.f32 %v1005, 0.0
  %v1024 = vmax.f32 %v1007, 0.0
  %v1025 = vld [vmem:[%s4] sm:$0xf]
  %v1026 = vld [vmem:[%s4 + $0x4] sm:$0xf]
  %v1027 = vld [vmem:[%s4 + $0x8] sm:$0xf]
  %v1028 = vld [vmem:[%s4 + $0xc] sm:$0xf]
  %v1029 = vld [vmem:[%s4 + $0x10] sm:$0xf]
  %v1030 = vld [vmem:[%s4 + $0x14] sm:$0xf]
  %v1031 = vld [vmem:[%s4 + $0x18] sm:$0xf]
  %v1032 = vld [vmem:[%s4 + $0x1c] sm:$0xf]
  %v1033 = vpack.c.bf16 %v1011, %v1009
  %v1034 = vpack.c.bf16 %v1012, %v1010
  %v1035 = vpack.c.bf16 %v1015, %v1013
  %v1036 = vpack.c.bf16 %v1016, %v1014
  %v1037 = vpack.c.bf16 %v1019, %v1017
  %v1038 = vpack.c.bf16 %v1020, %v1018
  %v1039 = vpack.c.bf16 %v1023, %v1021
  %v1040 = vpack.c.bf16 %v1024, %v1022
  %v1041 = vld [vmem:[%s5] sm:$0xff]
  %v1042 = vld [vmem:[%s5 + $0x8] sm:$0xff]
  %v1043 = vld [vmem:[%s5 + $0x10] sm:$0xff]
  %v1044 = vld [vmem:[%s5 + $0x18] sm:$0xff]
  %v1045 = vld [vmem:[%s5 + $0x20] sm:$0xff]
  %v1046 = vld [vmem:[%s5 + $0x28] sm:$0xff]
  %v1047 = vld [vmem:[%s5 + $0x30] sm:$0xff]
  %v1048 = vld [vmem:[%s5 + $0x38] sm:$0xff]
  %1050 = vset.pattern.permute.xlu0 0
  %1051 = vperm.xlu0 %1050, %v1041
  %v1052 = vpop.permute.xlu0 %1051
  %1055 = vset.pattern.permute.xlu0 0
  %1056 = vperm.xlu0 %1055, %v1042
  %v1057 = vpop.permute.xlu0 %1056
  %1060 = vset.pattern.permute.xlu0 0
  %1061 = vperm.xlu0 %1060, %v1043
  %v1062 = vpop.permute.xlu0 %1061
  %1065 = vset.pattern.permute.xlu0 0
  %1066 = vperm.xlu0 %1065, %v1044
  %v1067 = vpop.permute.xlu0 %1066
  %1070 = vset.pattern.permute.xlu0 0
  %1071 = vperm.xlu0 %1070, %v1045
  %v1072 = vpop.permute.xlu0 %1071
  %1075 = vset.pattern.permute.xlu0 0
  %1076 = vperm.xlu0 %1075, %v1046
  %v1077 = vpop.permute.xlu0 %1076
  %1080 = vset.pattern.permute.xlu0 0
  %1081 = vperm.xlu0 %1080, %v1047
  %v1082 = vpop.permute.xlu0 %1081
  %1085 = vset.pattern.permute.xlu0 0
  %1086 = vperm.xlu0 %1085, %v1048
  %v1087 = vpop.permute.xlu0 %1086
  %v1097 = vunpack.c.l.b16 %v1025
  %v1098 = vunpack.c.l.b16 %v1026
  %v1099 = vunpack.c.l.b16 %v1027
  %v1100 = vunpack.c.l.b16 %v1028
  %v1101 = vunpack.c.l.b16 %v1029
  %v1102 = vunpack.c.l.b16 %v1030
  %v1103 = vunpack.c.l.b16 %v1031
  %v1104 = vunpack.c.l.b16 %v1032
  %v1105 = vpack.c.b16 %v1098, %v1097
  %v1106 = vpack.c.b16 %v1100, %v1099
  %v1107 = vpack.c.b16 %v1102, %v1101
  %v1108 = vpack.c.b16 %v1104, %v1103
  %v1110 = vsel %vm184, %v1105, 0
  %v1113 = vsel %vm184, %v1106, 0
  %v1116 = vsel %vm184, %v1107, 0
  %v1119 = vsel %vm184, %v1108, 0
  %1121 = vmatprep.subr.bf16.mxu0 %v1034
  %1122 = vmatpush1.bf16.msra.mxu0 %v1033
  %1123 = vmatprep.subr.bf16.mxu0 %v1036
  %1124 = vmatpush1.bf16.msra.mxu0 %v1035
  %1125 = vmatprep.subr.bf16.mxu0 %v1038
  %1126 = vmatpush1.bf16.msra.mxu0 %v1037
  %1127 = vmatprep.subr.bf16.mxu0 %v1040
  %1128 = vmatpush1.bf16.msra.mxu0 %v1039
  %1129 = vmatprep.subr.bf16.mxu0 0
  %1130 = vmatpush1.bf16.msra.mxu0 0
  %1131 = vmatprep.subr.bf16.mxu0 0
  %1132 = vmatpush1.bf16.msra.mxu0 0
  %1133 = vmatprep.subr.bf16.mxu0 0
  %1134 = vmatpush1.bf16.msra.mxu0 0
  %1135 = vmatprep.subr.bf16.mxu0 0
  %1136 = vmatpush1.bf16.msra.mxu0 0
  %1137 = vmatprep.subr.bf16.mxu0 0
  %1138 = vmatpush1.bf16.msra.mxu0 0
  %1139 = vmatprep.subr.bf16.mxu0 0
  %1140 = vmatpush1.bf16.msra.mxu0 0
  %1141 = vmatprep.subr.bf16.mxu0 0
  %1142 = vmatpush1.bf16.msra.mxu0 0
  %1143 = vmatprep.subr.bf16.mxu0 0
  %1144 = vmatpush1.bf16.msra.mxu0 0
  %1145 = vmatprep.subr.bf16.mxu0 0
  %1146 = vmatpush1.bf16.msra.mxu0 0
  %1147 = vmatprep.subr.bf16.mxu0 0
  %1148 = vmatpush1.bf16.msra.mxu0 0
  %1149 = vmatprep.subr.bf16.mxu0 0
  %1150 = vmatpush1.bf16.msra.mxu0 0
  %1151 = vmatprep.subr.bf16.mxu0 0
  %1152 = vmatpush1.bf16.msra.mxu0 0
  %1153 = vmatprep.mubr.bf16.mxu0 0
  %1154 = vmatmul.mubr.bf16.gmra.mrb[0].mxu0 %v1110
  %v1155 = vpop.f32.mrb[0].mxu0
  %v1156 = vadd.f32 %v1052, %v1155
  %v1157 = vpop.f32.mrb[0].mxu0
  %v1158 = vadd.f32 %v1052, %v1157
  %v1159 = vpop.f32.mrb[0].mxu0
  %v1160 = vadd.f32 %v1057, %v1159
  %v1161 = vpop.f32.mrb[0].mxu0
  %v1162 = vadd.f32 %v1057, %v1161
  %1163 = vmatprep.mubr.bf16.mxu0 0
  %1164 = vmatmul.mubr.bf16.gmra.mrb[0].mxu0 %v1113
  %v1165 = vpop.f32.mrb[0].mxu0
  %v1166 = vadd.f32 %v1062, %v1165
  %v1167 = vpop.f32.mrb[0].mxu0
  %v1168 = vadd.f32 %v1062, %v1167
  %v1169 = vpop.f32.mrb[0].mxu0
  %v1170 = vadd.f32 %v1067, %v1169
  %v1171 = vpop.f32.mrb[0].mxu0
  %v1172 = vadd.f32 %v1067, %v1171
  %1173 = vmatprep.mubr.bf16.mxu0 0
  %1174 = vmatmul.mubr.bf16.gmra.mrb[0].mxu0 %v1116
  %v1175 = vpop.f32.mrb[0].mxu0
  %v1176 = vadd.f32 %v1072, %v1175
  %v1177 = vpop.f32.mrb[0].mxu0
  %v1178 = vadd.f32 %v1072, %v1177
  %v1179 = vpop.f32.mrb[0].mxu0
  %v1180 = vadd.f32 %v1077, %v1179
  %v1181 = vpop.f32.mrb[0].mxu0
  %v1182 = vadd.f32 %v1077, %v1181
  %1183 = vmatprep.mubr.bf16.mxu0 0
  %1184 = vmatmul.mubr.bf16.gmra.mrb[0].mxu0 %v1119
  %v1185 = vpop.f32.mrb[0].mxu0
  %v1186 = vadd.f32 %v1082, %v1185
  %v1187 = vpop.f32.mrb[0].mxu0
  %v1188 = vadd.f32 %v1082, %v1187
  %v1189 = vpop.f32.mrb[0].mxu0
  %v1190 = vadd.f32 %v1087, %v1189
  %v1191 = vpop.f32.mrb[0].mxu0
  %v1192 = vadd.f32 %v1087, %v1191
  %1193 = vdwg.mxu0
  %1195 = vset.pattern.permute.xlu0 0
  %1196 = vperm.xlu0 %1195, %v832
  %v1197 = vpop.permute.xlu0 %1196
  %1200 = vset.pattern.permute.xlu0 0
  %1201 = vperm.xlu0 %1200, %v833
  %v1202 = vpop.permute.xlu0 %1201
  %1205 = vset.pattern.permute.xlu0 0
  %1206 = vperm.xlu0 %1205, %v834
  %v1207 = vpop.permute.xlu0 %1206
  %1210 = vset.pattern.permute.xlu0 0
  %1211 = vperm.xlu0 %1210, %v835
  %v1212 = vpop.permute.xlu0 %1211
  %1215 = vset.pattern.permute.xlu0 0
  %1216 = vperm.xlu0 %1215, %v836
  %v1217 = vpop.permute.xlu0 %1216
  %1220 = vset.pattern.permute.xlu0 0
  %1221 = vperm.xlu0 %1220, %v837
  %v1222 = vpop.permute.xlu0 %1221
  %1225 = vset.pattern.permute.xlu0 0
  %1226 = vperm.xlu0 %1225, %v838
  %v1227 = vpop.permute.xlu0 %1226
  %1230 = vset.pattern.permute.xlu0 0
  %1231 = vperm.xlu0 %1230, %v839
  %v1232 = vpop.permute.xlu0 %1231
  %v1234 = vadd.f32 %v1156, %v1197
  %v1235 = vadd.f32 %v1158, %v1197
  %v1236 = vadd.f32 %v1160, %v1202
  %v1237 = vadd.f32 %v1162, %v1202
  %v1238 = vadd.f32 %v1166, %v1207
  %v1239 = vadd.f32 %v1168, %v1207
  %v1240 = vadd.f32 %v1170, %v1212
  %v1241 = vadd.f32 %v1172, %v1212
  %v1242 = vadd.f32 %v1176, %v1217
  %v1243 = vadd.f32 %v1178, %v1217
  %v1244 = vadd.f32 %v1180, %v1222
  %v1245 = vadd.f32 %v1182, %v1222
  %v1246 = vadd.f32 %v1186, %v1227
  %v1247 = vadd.f32 %v1188, %v1227
  %v1248 = vadd.f32 %v1190, %v1232
  %v1249 = vadd.f32 %v1192, %v1232
  %v1250 = vxor.u32 %v1234, 2147483648
  %v1251 = vxor.u32 %v1235, 2147483648
  %v1252 = vxor.u32 %v1236, 2147483648
  %v1253 = vxor.u32 %v1237, 2147483648
  %v1254 = vxor.u32 %v1238, 2147483648
  %v1255 = vxor.u32 %v1239, 2147483648
  %v1256 = vxor.u32 %v1240, 2147483648
  %v1257 = vxor.u32 %v1241, 2147483648
  %v1258 = vxor.u32 %v1242, 2147483648
  %v1259 = vxor.u32 %v1243, 2147483648
  %v1260 = vxor.u32 %v1244, 2147483648
  %v1261 = vxor.u32 %v1245, 2147483648
  %v1262 = vxor.u32 %v1246, 2147483648
  %v1263 = vxor.u32 %v1247, 2147483648
  %v1264 = vxor.u32 %v1248, 2147483648
  %v1265 = vxor.u32 %v1249, 2147483648
  %v1266 = vmul.f32 %v1250, 1.442695
  %v1267 = vpow.pop %v1266
  %v1268 = vmul.f32 %v1251, 1.442695
  %v1269 = vpow.pop %v1268
  %v1270 = vmul.f32 %v1252, 1.442695
  %v1271 = vpow.pop %v1270
  %v1272 = vmul.f32 %v1253, 1.442695
  %v1273 = vpow.pop %v1272
  %v1274 = vmul.f32 %v1254, 1.442695
  %v1275 = vpow.pop %v1274
  %v1276 = vmul.f32 %v1255, 1.442695
  %v1277 = vpow.pop %v1276
  %v1278 = vmul.f32 %v1256, 1.442695
  %v1279 = vpow.pop %v1278
  %v1280 = vmul.f32 %v1257, 1.442695
  %v1281 = vpow.pop %v1280
  %v1282 = vmul.f32 %v1258, 1.442695
  %v1283 = vpow.pop %v1282
  %v1284 = vmul.f32 %v1259, 1.442695
  %v1285 = vpow.pop %v1284
  %v1286 = vmul.f32 %v1260, 1.442695
  %v1287 = vpow.pop %v1286
  %v1288 = vmul.f32 %v1261, 1.442695
  %v1289 = vpow.pop %v1288
  %v1290 = vmul.f32 %v1262, 1.442695
  %v1291 = vpow.pop %v1290
  %v1292 = vmul.f32 %v1263, 1.442695
  %v1293 = vpow.pop %v1292
  %v1294 = vmul.f32 %v1264, 1.442695
  %v1295 = vpow.pop %v1294
  %v1296 = vmul.f32 %v1265, 1.442695
  %v1297 = vpow.pop %v1296
  %v1298 = vadd.f32 %v1267, 1.0
  %v1299 = vadd.f32 %v1269, 1.0
  %v1300 = vadd.f32 %v1271, 1.0
  %v1301 = vadd.f32 %v1273, 1.0
  %v1302 = vadd.f32 %v1275, 1.0
  %v1303 = vadd.f32 %v1277, 1.0
  %v1304 = vadd.f32 %v1279, 1.0
  %v1305 = vadd.f32 %v1281, 1.0
  %v1306 = vadd.f32 %v1283, 1.0
  %v1307 = vadd.f32 %v1285, 1.0
  %v1308 = vadd.f32 %v1287, 1.0
  %v1309 = vadd.f32 %v1289, 1.0
  %v1310 = vadd.f32 %v1291, 1.0
  %v1311 = vadd.f32 %v1293, 1.0
  %v1312 = vadd.f32 %v1295, 1.0
  %v1313 = vadd.f32 %v1297, 1.0
  %v1314 = vrcp.pop %v1298
  %v1315 = vmul.f32 1.0, %v1314
  %v1316 = vrcp.pop %v1299
  %v1317 = vmul.f32 1.0, %v1316
  %v1318 = vrcp.pop %v1300
  %v1319 = vmul.f32 1.0, %v1318
  %v1320 = vrcp.pop %v1301
  %v1321 = vmul.f32 1.0, %v1320
  %v1322 = vrcp.pop %v1302
  %v1323 = vmul.f32 1.0, %v1322
  %v1324 = vrcp.pop %v1303
  %v1325 = vmul.f32 1.0, %v1324
  %v1326 = vrcp.pop %v1304
  %v1327 = vmul.f32 1.0, %v1326
  %v1328 = vrcp.pop %v1305
  %v1329 = vmul.f32 1.0, %v1328
  %v1330 = vrcp.pop %v1306
  %v1331 = vmul.f32 1.0, %v1330
  %v1332 = vrcp.pop %v1307
  %v1333 = vmul.f32 1.0, %v1332
  %v1334 = vrcp.pop %v1308
  %v1335 = vmul.f32 1.0, %v1334
  %v1336 = vrcp.pop %v1309
  %v1337 = vmul.f32 1.0, %v1336
  %v1338 = vrcp.pop %v1310
  %v1339 = vmul.f32 1.0, %v1338
  %v1340 = vrcp.pop %v1311
  %v1341 = vmul.f32 1.0, %v1340
  %v1342 = vrcp.pop %v1312
  %v1343 = vmul.f32 1.0, %v1342
  %v1344 = vrcp.pop %v1313
  %v1345 = vmul.f32 1.0, %v1344
  %v1346 = vsub.f32 %v48, %v64
  %v1347 = vsub.f32 %v49, %v65
  %v1348 = vsub.f32 %v50, %v66
  %v1349 = vsub.f32 %v51, %v67
  %v1350 = vsub.f32 %v52, %v68
  %v1351 = vsub.f32 %v53, %v69
  %v1352 = vsub.f32 %v54, %v70
  %v1353 = vsub.f32 %v55, %v71
  %v1354 = vsub.f32 %v56, %v72
  %v1355 = vsub.f32 %v57, %v73
  %v1356 = vsub.f32 %v58, %v74
  %v1357 = vsub.f32 %v59, %v75
  %v1358 = vsub.f32 %v60, %v76
  %v1359 = vsub.f32 %v61, %v77
  %v1360 = vsub.f32 %v62, %v78
  %v1361 = vsub.f32 %v63, %v79
  %v1362 = vmul.f32 %v1346, %v1315
  %v1363 = vmul.f32 %v1347, %v1317
  %v1364 = vmul.f32 %v1348, %v1319
  %v1365 = vmul.f32 %v1349, %v1321
  %v1366 = vmul.f32 %v1350, %v1323
  %v1367 = vmul.f32 %v1351, %v1325
  %v1368 = vmul.f32 %v1352, %v1327
  %v1369 = vmul.f32 %v1353, %v1329
  %v1370 = vmul.f32 %v1354, %v1331
  %v1371 = vmul.f32 %v1355, %v1333
  %v1372 = vmul.f32 %v1356, %v1335
  %v1373 = vmul.f32 %v1357, %v1337
  %v1374 = vmul.f32 %v1358, %v1339
  %v1375 = vmul.f32 %v1359, %v1341
  %v1376 = vmul.f32 %v1360, %v1343
  %v1377 = vmul.f32 %v1361, %v1345
  %v1378 = vadd.f32 %v64, %v1362
  %v1379 = vadd.f32 %v65, %v1363
  %v1380 = vadd.f32 %v66, %v1364
  %v1381 = vadd.f32 %v67, %v1365
  %v1382 = vadd.f32 %v68, %v1366
  %v1383 = vadd.f32 %v69, %v1367
  %v1384 = vadd.f32 %v70, %v1368
  %v1385 = vadd.f32 %v71, %v1369
  %v1386 = vadd.f32 %v72, %v1370
  %v1387 = vadd.f32 %v73, %v1371
  %v1388 = vadd.f32 %v74, %v1372
  %v1389 = vadd.f32 %v75, %v1373
  %v1390 = vadd.f32 %v76, %v1374
  %v1391 = vadd.f32 %v77, %v1375
  %v1392 = vadd.f32 %v78, %v1376
  %v1393 = vadd.f32 %v79, %v1377
  %v1394 = vmul.f32 %v1378, 2.0
  %v1395 = vmul.f32 %v1379, 2.0
  %v1396 = vmul.f32 %v1380, 2.0
  %v1397 = vmul.f32 %v1381, 2.0
  %v1398 = vmul.f32 %v1382, 2.0
  %v1399 = vmul.f32 %v1383, 2.0
  %v1400 = vmul.f32 %v1384, 2.0
  %v1401 = vmul.f32 %v1385, 2.0
  %v1402 = vmul.f32 %v1386, 2.0
  %v1403 = vmul.f32 %v1387, 2.0
  %v1404 = vmul.f32 %v1388, 2.0
  %v1405 = vmul.f32 %v1389, 2.0
  %v1406 = vmul.f32 %v1390, 2.0
  %v1407 = vmul.f32 %v1391, 2.0
  %v1408 = vmul.f32 %v1392, 2.0
  %v1409 = vmul.f32 %v1393, 2.0
  %1410 = vst [vmem:[%s14] sm:$0xff] %v1394
  %1411 = vst [vmem:[%s14 + $0x8] sm:$0xff] %v1395
  %1412 = vst [vmem:[%s14 + $0x10] sm:$0xff] %v1396
  %1413 = vst [vmem:[%s14 + $0x18] sm:$0xff] %v1397
  %1414 = vst [vmem:[%s14 + $0x20] sm:$0xff] %v1398
  %1415 = vst [vmem:[%s14 + $0x28] sm:$0xff] %v1399
  %1416 = vst [vmem:[%s14 + $0x30] sm:$0xff] %v1400
  %1417 = vst [vmem:[%s14 + $0x38] sm:$0xff] %v1401
  %1418 = vst [vmem:[%s14 + $0x40] sm:$0xff] %v1402
  %1419 = vst [vmem:[%s14 + $0x48] sm:$0xff] %v1403
  %1420 = vst [vmem:[%s14 + $0x50] sm:$0xff] %v1404
  %1421 = vst [vmem:[%s14 + $0x58] sm:$0xff] %v1405
  %1422 = vst [vmem:[%s14 + $0x60] sm:$0xff] %v1406
  %1423 = vst [vmem:[%s14 + $0x68] sm:$0xff] %v1407
  %1424 = vst [vmem:[%s14 + $0x70] sm:$0xff] %v1408
  %1425 = vst [vmem:[%s14 + $0x78] sm:$0xff] %v1409
  // Predicated region
  $region58: #{aff_forward.1} parent=0 // pred_check
    _
  $region59: #{aff_forward.1} parent=0 // pred_check_branch
    %1427 = sbr.rel (0) target = $region61
  $region60: #{aff_forward.1} parent=0 // pred_region
    _
  $region61: #{aff_forward.1} parent=0 // pred_fallthru
    _
  // Predicated region
  $region62: #{aff_forward.1} parent=0 // pred_check
    _
  $region63: #{aff_forward.1} parent=0 // pred_check_branch
    %1429 = sbr.rel (0) target = $region65
  $region64: #{aff_forward.1} parent=0 // pred_region
    _
  $region65: #{aff_forward.1} parent=0 // pred_fallthru
    _

</llo_original>
